<compile_context>
chip_gen: v5e
topology: v5e:2x2
jax: 0.10.0
libtpu: 0.0.40
codegen_flags: <defaults>
</compile_context>

<pallas_src>
import math
import functools

import jax
import jax.numpy as jnp
from jax import lax
from jax.experimental import pallas as pl
from jax.experimental.pallas import tpu as pltpu


# ----------------------------- Pallas kernel --------------------------------

def _mmha_kernel(sigma_ref, x_ref, wbig_ref, vec_ref, out_ref, *,
                 C, ndim, n_heads, n_dot, n_hidden, T, wcol_offsets):
    """Modulated multi-head centroid cross-attention forward (single program).

    sigma_ref : (B, 1)        diffusion time / sigma
    x_ref     : (B, ndim)     points
    wbig_ref  : (R, Ltot)     packed [wmod | Kblk | VOnes | Wo | Wq] slab
    vec_ref   : (6, L)        packed rows: fourier*2pi, phase, b_mod1, b_mod2,
                              b_q, b_o
    out_ref   : (B, ndim)
    """
    Hd = n_heads * n_dot
    Hh = n_heads * n_hidden
    HC = n_heads * C
    o_mod, o_k, o_v, o_wo, o_wq = wcol_offsets

    # ---- packed per-row vectors (one VMEM tile) ----
    fw2pi = vec_ref[0:1, :T]        # (1, T)  fourier freqs * 2*pi, duplicated
    phase = vec_ref[1:2, :T]        # (1, T)  [0,...,0, pi/2,...,pi/2]
    b_m1 = vec_ref[2:3, :Hd]        # mod1 bias, per-head tiled, *1/sqrt(n_dot)
    b_m2 = vec_ref[3:4, :Hh]        # mod2 bias, per-head tiled
    b_q = vec_ref[4:5, :Hd]
    b_o = vec_ref[5:6, :ndim]

    # ---- Gaussian Fourier embedding, in-kernel (EUP slot is otherwise idle).
    # [sin(t), cos(t)] emitted as ONE lane-dense sin since cos(x) = sin(x+pi/2).
    emb = jnp.sin(sigma_ref[...] * fw2pi + phase)                      # (B, T)

    # ---- sigma modulation: one matmul; 1/sqrt(n_dot) pre-folded into mod1 half.
    mod = jnp.dot(emb, wbig_ref[:T, o_mod:o_mod + Hd + Hh],
                  preferred_element_type=jnp.float32)                  # (B, Hd+Hh)
    mod1 = mod[:, :Hd] + b_m1
    mod2 = mod[:, Hd:] + b_m2

    # ---- query projection + modulation (centroid K/V folded at prepare time).
    q = jnp.dot(x_ref[...], wbig_ref[:ndim, o_wq:o_wq + Hd],
                preferred_element_type=jnp.float32) + b_q              # (B, Hd)
    qm = q * mod1

    # ---- ALL heads' attention scores in one lane-dense matmul (block-diag K^T).
    s = jnp.dot(qm, wbig_ref[:Hd, o_k:o_k + HC],
                preferred_element_type=jnp.float32)                    # (B, HC)

    # ---- per-head (segmented) max for a numerically stable softmax; full-width
    # masked reductions only -- no off-128-lane slices, no reshapes.
    lane = lax.broadcasted_iota(jnp.int32, s.shape, 1)
    m_bcast = jnp.zeros_like(s)
    for h in range(n_heads):                                           # static unroll
        mask = jnp.logical_and(lane >= h * C, lane < (h + 1) * C)
        m_h = jnp.max(jnp.where(mask, s, -jnp.inf), axis=-1, keepdims=True)
        m_bcast = jnp.where(mask, m_h, m_bcast)
    p = jnp.exp(s - m_bcast)                                           # (B, HC)

    # ---- ALL heads' value mix AND per-head softmax denominators in one matmul
    # via block-diag [V | 1]; denominators arrive pre-broadcast over n_hidden lanes.
    hv_l = jnp.dot(p, wbig_ref[:HC, o_v:o_v + 2 * Hh],
                   preferred_element_type=jnp.float32)                 # (B, 2*Hh)
    hv = (hv_l[:, :Hh] * mod2) / hv_l[:, Hh:]      # exact normalization

    # ---- output projection.
    out = jnp.dot(hv, wbig_ref[:Hh, o_wo:o_wo + ndim],
                  preferred_element_type=jnp.float32) + b_o            # (B, ndim)
    # TODO(synk): for very large B, emit a lane-dense (B, 128) padded tile and
    # slice [:, :ndim] in the wrapper instead of this 16-lane masked store.
    out_ref[...] = out.astype(out_ref.dtype)


# --------------------------- parameter packing -------------------------------

def prepare_params(params, *, n_heads, n_dot, n_hidden):
    """One-time re-layout of PyTorch-style parameters into the kernel's fused form.

    Every transpose / tile / scale, the centroid-side K/V projections and the
    block-diagonal packing happen here exactly once; the kernel sees only two
    packed f32 buffers.
    """
    f32 = jnp.float32
    Hd = n_heads * n_dot
    Hh = n_heads * n_hidden
    scale = 1.0 / math.sqrt(n_dot)

    centroids = params["centroids"].astype(f32)
    C = centroids.shape[0]
    HC = n_heads * C
    T = 2 * params["fourier_W"].shape[0]
    ndim = params["Wq_w"].shape[1]

    # --- centroid-side projections are input independent: fold them here. ---
    k_full = centroids @ params["Wk_w"].astype(f32).T + params["Wk_b"].astype(f32)  # (C, Hd)
    v_full = centroids @ params["Wv_w"].astype(f32).T + params["Wv_b"].astype(f32)  # (C, Hh)

    # --- block-diagonal K^T / [V | 1] so all heads fuse into ONE matmul each. ---
    kblk = jnp.zeros((Hd, HC), f32)
    vones = jnp.zeros((HC, 2 * Hh), f32)
    for h in range(n_heads):
        kblk = kblk.at[h * n_dot:(h + 1) * n_dot, h * C:(h + 1) * C].set(
            k_full[:, h * n_dot:(h + 1) * n_dot].T)
        vones = vones.at[h * C:(h + 1) * C,
                         h * n_hidden:(h + 1) * n_hidden].set(
            v_full[:, h * n_hidden:(h + 1) * n_hidden])
        vones = vones.at[h * C:(h + 1) * C,
                         Hh + h * n_hidden:Hh + (h + 1) * n_hidden].set(1.0)

    # --- sigma-mod weights tiled per head; attention scale folded into mod1. ---
    wmod = jnp.concatenate(
        [jnp.tile(params["mod1_w"].astype(f32).T * scale, (1, n_heads)),
         jnp.tile(params["mod2_w"].astype(f32).T, (1, n_heads))], axis=1)   # (T, Hd+Hh)

    wq = params["Wq_w"].astype(f32).T      # (ndim, Hd)
    wo = params["Wo_w"].astype(f32).T      # (Hh, ndim)

    # --- pack all weight matrices into one lane-aligned slab -> single DMA. ---
    # TODO(synk): cast the slab to bfloat16 for v5e once the tolerance impact of
    # the folded 1/sqrt(n_dot) scale on mod1 is validated (perf-review v5e item).
    mats = [wmod, kblk, vones, wo, wq]
    nrows = max(m.shape[0] for m in mats)
    packed, offsets, cur = [], [], 0
    for m in mats:
        r, c = m.shape
        cpad = (-c) % 128
        packed.append(jnp.pad(m, ((0, nrows - r), (0, cpad))))
        offsets.append(cur)
        cur += c + cpad
    wbig = jnp.concatenate(packed, axis=1)                                  # (nrows, Ltot)

    # --- pack fourier freqs / phase + every bias into one small row buffer. ---
    fw2pi = jnp.tile(params["fourier_W"].astype(f32) * (2.0 * math.pi), 2)  # (T,)
    phase = jnp.concatenate([jnp.zeros((T // 2,), f32),
                             jnp.full((T // 2,), math.pi / 2.0, f32)])      # cos(x)=sin(x+pi/2)
    rows = [fw2pi,
            phase,
            jnp.tile(params["mod1_b"].astype(f32) * scale, n_heads),        # (Hd,)
            jnp.tile(params["mod2_b"].astype(f32), n_heads),                # (Hh,)
            params["Wq_b"].astype(f32),                                     # (Hd,)
            params["Wo_b"].astype(f32)]                                     # (ndim,)
    L = max(r.shape[0] for r in rows)
    L += (-L) % 128
    vec = jnp.stack([jnp.pad(r, (0, L - r.shape[0])) for r in rows])        # (6, L)

    return {"wbig": wbig, "vec": vec,
            "wcol_offsets": tuple(int(o) for o in offsets),
            "dims": {"C": C, "T": T, "ndim": ndim}}


# ------------------------------ wrapper --------------------------------------

def mmha_forward(x, sigma, wbig, vec, *, n_heads, n_dot, n_hidden, C, T,
                 wcol_offsets):
    """Pallas-backed forward of ModulatedMultiHeadAttention."""
    B, ndim = x.shape
    kernel = functools.partial(
        _mmha_kernel, C=C, ndim=ndim, n_heads=n_heads, n_dot=n_dot,
        n_hidden=n_hidden, T=T, wcol_offsets=wcol_offsets)

    vmem = pl.BlockSpec(memory_space=pltpu.MemorySpace.VMEM)
    # Grid-less: the whole working set (< 1 MiB) fits VMEM on v5e/v6e/v7x.
    # The kernel at these shapes is launch/DMA-latency bound: amortize by
    # batching many (x, sigma) rows per call rather than micro-optimizing.
    # TODO(synk): for B in the thousands, add grid=(B // TB,) with
    # BlockSpec((TB, ...), lambda i: (i, 0)) on sigma/x/out and
    # dimension_semantics=("parallel",) so both v7x TensorCores are used.
    return pl.pallas_call(
        kernel,
        out_shape=jax.ShapeDtypeStruct((B, ndim), jnp.float32),
        in_specs=[vmem] * 4,
        out_specs=vmem,
        compiler_params=pltpu.CompilerParams(vmem_limit_bytes=4 * 1024 * 1024),
    )(sigma.reshape(B, 1).astype(jnp.float32), x.astype(jnp.float32), wbig, vec)


# --------------------------- reference (pure JAX) -----------------------------

def mmha_reference(x, sigma, params, *, n_heads, n_dot, n_hidden):
    B = x.shape[0]
    C = params["centroids"].shape[0]
    t_proj = sigma[:, None] * params["fourier_W"][None, :] * 2.0 * math.pi
    emb = jnp.concatenate([jnp.sin(t_proj), jnp.cos(t_proj)], axis=-1)
    mod1 = emb @ params["mod1_w"].T + params["mod1_b"]
    mod2 = emb @ params["mod2_w"].T + params["mod2_b"]
    q = x @ params["Wq_w"].T + params["Wq_b"]
    k = params["centroids"] @ params["Wk_w"].T + params["Wk_b"]
    v = params["centroids"] @ params["Wv_w"].T + params["Wv_b"]
    q = q.reshape(B, n_heads, n_dot)
    k = k.reshape(C, n_heads, n_dot)
    v = v.reshape(C, n_heads, n_hidden)
    attn = jnp.einsum("Bhd,Chd->hBC", q * mod1[:, None, :], k)
    attn_score = jax.nn.softmax(attn / math.sqrt(n_dot), axis=-1)
    head_values = jnp.einsum("hBC,Chd->Bhd", attn_score, v)
    head_values = head_values * mod2[:, None, :]
    out = head_values.reshape(B, n_heads * n_hidden) @ params["Wo_w"].T + params["Wo_b"]
    return out


# ------------------------------- main -----------------------------------------

def _linear_init(key, out_features, in_features):
    # Deterministic PyTorch-like uniform(-1/sqrt(in), 1/sqrt(in)) init.
    kw, kb = jax.random.split(key)
    bound = 1.0 / math.sqrt(in_features)
    w = jax.random.uniform(kw, (out_features, in_features),
                           minval=-bound, maxval=bound, dtype=jnp.float32)
    b = jax.random.uniform(kb, (out_features,),
                           minval=-bound, maxval=bound, dtype=jnp.float32)
    return w, b


if __name__ == "__main__":
    # Small shapes consistent with the module (scaled down).
    ndim = 16
    n_centroids = 32
    n_dot = 32
    n_hidden = 32
    n_heads = 4
    time_embed_dim = 128
    B = 64  # npnts

    key = jax.random.PRNGKey(0)
    keys = jax.random.split(key, 10)

    x = jax.random.normal(keys[0], (B, ndim), dtype=jnp.float32)
    # sigma plays the role of diffusion time t in (0, 1] in the training loop.
    sigma = jax.random.uniform(keys[1], (B,), dtype=jnp.float32,
                               minval=1e-3, maxval=1.0)

    centroids = jax.random.normal(keys[2], (n_centroids, ndim), dtype=jnp.float32)
    centroids = centroids / jnp.linalg.norm(centroids, axis=1, keepdims=True)

    wq_w, wq_b = _linear_init(keys[3], n_dot * n_heads, ndim)
    wk_w, wk_b = _linear_init(keys[4], n_dot * n_heads, ndim)
    wv_w, wv_b = _linear_init(keys[5], n_hidden * n_heads, ndim)
    wo_w, wo_b = _linear_init(keys[6], ndim, n_hidden * n_heads)
    m1_w, m1_b = _linear_init(keys[7], n_dot, time_embed_dim)
    m2_w, m2_b = _linear_init(keys[8], n_hidden, time_embed_dim)
    fourier_W = jax.random.normal(keys[9], (time_embed_dim // 2,),
                                  dtype=jnp.float32) * 30.0

    params = {
        "Wq_w": wq_w, "Wq_b": wq_b,
        "Wk_w": wk_w, "Wk_b": wk_b,
        "Wv_w": wv_w, "Wv_b": wv_b,
        "Wo_w": wo_w, "Wo_b": wo_b,
        "mod1_w": m1_w, "mod1_b": m1_b,
        "mod2_w": m2_w, "mod2_b": m2_b,
        "fourier_W": fourier_W,
        "centroids": centroids,
    }

    prepped = prepare_params(params, n_heads=n_heads, n_dot=n_dot,
                             n_hidden=n_hidden)

    fwd = jax.jit(functools.partial(
        mmha_forward,
        n_heads=n_heads, n_dot=n_dot, n_hidden=n_hidden,
        C=prepped["dims"]["C"], T=prepped["dims"]["T"],
        wcol_offsets=prepped["wcol_offsets"]))

    out = fwd(x, sigma, prepped["wbig"], prepped["vec"])
    out = jax.block_until_ready(out)

    ref = mmha_reference(x, sigma, params,
                         n_heads=n_heads, n_dot=n_dot, n_hidden=n_hidden)
    assert out.shape == (B, ndim)
    max_err = jnp.max(jnp.abs(out - ref))
    assert jnp.allclose(out, ref, atol=3e-3, rtol=3e-3), f"max abs err {max_err}"

    print("KERNEL_OK")
</pallas_src>

<mosaic_0001>
module attributes {stable_mosaic.version = 11 : i64} {
  func.func @_mmha_kernel(%arg0: memref<64x1xf32, #tpu.memory_space<vmem>>, %arg1: memref<64x16xf32, #tpu.memory_space<vmem>>, %arg2: memref<128x896xf32, #tpu.memory_space<vmem>>, %arg3: memref<6x128xf32, #tpu.memory_space<vmem>>, %arg4: memref<64x16xf32, #tpu.memory_space<vmem>>) attributes {dimension_semantics = [], scalar_prefetch = 0 : i64, scratch_operands = 0 : i64, tpu.core_type = #tpu.core_type<tc>} {
    %c0 = arith.constant 0 : index
    %c0_0 = arith.constant 0 : index
    %0 = vector.load %arg3[%c0, %c0_0] : memref<6x128xf32, #tpu.memory_space<vmem>>, vector<1x128xf32>
    %c1 = arith.constant 1 : index
    %c0_1 = arith.constant 0 : index
    %1 = vector.load %arg3[%c1, %c0_1] : memref<6x128xf32, #tpu.memory_space<vmem>>, vector<1x128xf32>
    %c2 = arith.constant 2 : index
    %c0_2 = arith.constant 0 : index
    %2 = vector.load %arg3[%c2, %c0_2] : memref<6x128xf32, #tpu.memory_space<vmem>>, vector<1x128xf32>
    %c3 = arith.constant 3 : index
    %c0_3 = arith.constant 0 : index
    %3 = vector.load %arg3[%c3, %c0_3] : memref<6x128xf32, #tpu.memory_space<vmem>>, vector<1x128xf32>
    %c4 = arith.constant 4 : index
    %c0_4 = arith.constant 0 : index
    %4 = vector.load %arg3[%c4, %c0_4] : memref<6x128xf32, #tpu.memory_space<vmem>>, vector<1x128xf32>
    %c5 = arith.constant 5 : index
    %c0_5 = arith.constant 0 : index
    %5 = vector.load %arg3[%c5, %c0_5] : memref<6x128xf32, #tpu.memory_space<vmem>>, vector<1x16xf32>
    %c0_6 = arith.constant 0 : index
    %c0_7 = arith.constant 0 : index
    %6 = vector.load %arg0[%c0_6, %c0_7] : memref<64x1xf32, #tpu.memory_space<vmem>>, vector<64x1xf32>
    %7 = vector.broadcast %6 : vector<64x1xf32> to vector<64x128xf32>
    %8 = vector.broadcast %0 : vector<1x128xf32> to vector<64x128xf32>
    %9 = arith.mulf %7, %8 : vector<64x128xf32>
    %10 = vector.broadcast %1 : vector<1x128xf32> to vector<64x128xf32>
    %11 = arith.addf %9, %10 : vector<64x128xf32>
    %12 = math.sin %11 : vector<64x128xf32>
    %c0_8 = arith.constant 0 : index
    %c0_9 = arith.constant 0 : index
    %13 = vector.load %arg2[%c0_8, %c0_9] : memref<128x896xf32, #tpu.memory_space<vmem>>, vector<128x256xf32>
    %cst = arith.constant dense<0.000000e+00> : vector<64x256xf32>
    %14 = tpu.matmul %12, %13, %cst {dimension_numbers = #tpu.dot_dimension_numbers<[1], [0], [0], [1], [0, 0, 1, 1], [], []>} : vector<64x128xf32>, vector<128x256xf32>, vector<64x256xf32> -> vector<64x256xf32>
    %15 = vector.extract_strided_slice %14 {offsets = [0, 0], sizes = [64, 128], strides = [1, 1]} : vector<64x256xf32> to vector<64x128xf32>
    %16 = vector.broadcast %2 : vector<1x128xf32> to vector<64x128xf32>
    %17 = arith.addf %15, %16 : vector<64x128xf32>
    %18 = vector.extract_strided_slice %14 {offsets = [0, 128], sizes = [64, 128], strides = [1, 1]} : vector<64x256xf32> to vector<64x128xf32>
    %19 = vector.broadcast %3 : vector<1x128xf32> to vector<64x128xf32>
    %20 = arith.addf %18, %19 : vector<64x128xf32>
    %c0_10 = arith.constant 0 : index
    %c0_11 = arith.constant 0 : index
    %21 = vector.load %arg1[%c0_10, %c0_11] : memref<64x16xf32, #tpu.memory_space<vmem>>, vector<64x16xf32>
    %c0_12 = arith.constant 0 : index
    %c768 = arith.constant 768 : index
    %22 = vector.load %arg2[%c0_12, %c768] : memref<128x896xf32, #tpu.memory_space<vmem>>, vector<16x128xf32>
    %cst_13 = arith.constant dense<0.000000e+00> : vector<64x128xf32>
    %23 = tpu.matmul %21, %22, %cst_13 {dimension_numbers = #tpu.dot_dimension_numbers<[1], [0], [0], [1], [0, 0, 1, 1], [], []>} : vector<64x16xf32>, vector<16x128xf32>, vector<64x128xf32> -> vector<64x128xf32>
    %24 = vector.broadcast %4 : vector<1x128xf32> to vector<64x128xf32>
    %25 = arith.addf %23, %24 : vector<64x128xf32>
    %26 = arith.mulf %25, %17 : vector<64x128xf32>
    %c0_14 = arith.constant 0 : index
    %c256 = arith.constant 256 : index
    %27 = vector.load %arg2[%c0_14, %c256] : memref<128x896xf32, #tpu.memory_space<vmem>>, vector<128x128xf32>
    %cst_15 = arith.constant dense<0.000000e+00> : vector<64x128xf32>
    %28 = tpu.matmul %26, %27, %cst_15 {dimension_numbers = #tpu.dot_dimension_numbers<[1], [0], [0], [1], [0, 0, 1, 1], [], []>} : vector<64x128xf32>, vector<128x128xf32>, vector<64x128xf32> -> vector<64x128xf32>
    %29 = tpu.iota {dimensions = array<i32: 1>} : vector<64x128xi32>
    %cst_16 = arith.constant 0.000000e+00 : f32
    %30 = vector.broadcast %cst_16 : f32 to vector<64x128xf32>
    %c0_i32 = arith.constant 0 : i32
    %31 = vector.broadcast %c0_i32 : i32 to vector<64x128xi32>
    %32 = arith.cmpi sge, %29, %31 : vector<64x128xi32>
    %c32_i32 = arith.constant 32 : i32
    %33 = vector.broadcast %c32_i32 : i32 to vector<64x128xi32>
    %34 = arith.cmpi slt, %29, %33 : vector<64x128xi32>
    %35 = arith.andi %32, %34 : vector<64x128xi1>
    %cst_17 = arith.constant 0xFF800000 : f32
    %36 = vector.broadcast %cst_17 : f32 to vector<64x128xf32>
    %37 = arith.select %35, %28, %36 : vector<64x128xi1>, vector<64x128xf32>
    %cst_18 = arith.constant dense<0xFF800000> : vector<64xf32>
    %38 = vector.multi_reduction <maximumf>, %37, %cst_18 [1] : vector<64x128xf32> to vector<64xf32>
    %39 = vector.shape_cast %38 : vector<64xf32> to vector<64x1xf32>
    %40 = vector.shape_cast %39 : vector<64x1xf32> to vector<64x1xf32>
    %41 = vector.broadcast %40 : vector<64x1xf32> to vector<64x128xf32>
    %42 = arith.select %35, %41, %30 : vector<64x128xi1>, vector<64x128xf32>
    %c32_i32_19 = arith.constant 32 : i32
    %43 = vector.broadcast %c32_i32_19 : i32 to vector<64x128xi32>
    %44 = arith.cmpi sge, %29, %43 : vector<64x128xi32>
    %c64_i32 = arith.constant 64 : i32
    %45 = vector.broadcast %c64_i32 : i32 to vector<64x128xi32>
    %46 = arith.cmpi slt, %29, %45 : vector<64x128xi32>
    %47 = arith.andi %44, %46 : vector<64x128xi1>
    %cst_20 = arith.constant 0xFF800000 : f32
    %48 = vector.broadcast %cst_20 : f32 to vector<64x128xf32>
    %49 = arith.select %47, %28, %48 : vector<64x128xi1>, vector<64x128xf32>
    %cst_21 = arith.constant dense<0xFF800000> : vector<64xf32>
    %50 = vector.multi_reduction <maximumf>, %49, %cst_21 [1] : vector<64x128xf32> to vector<64xf32>
    %51 = vector.shape_cast %50 : vector<64xf32> to vector<64x1xf32>
    %52 = vector.shape_cast %51 : vector<64x1xf32> to vector<64x1xf32>
    %53 = vector.broadcast %52 : vector<64x1xf32> to vector<64x128xf32>
    %54 = arith.select %47, %53, %42 : vector<64x128xi1>, vector<64x128xf32>
    %c64_i32_22 = arith.constant 64 : i32
    %55 = vector.broadcast %c64_i32_22 : i32 to vector<64x128xi32>
    %56 = arith.cmpi sge, %29, %55 : vector<64x128xi32>
    %c96_i32 = arith.constant 96 : i32
    %57 = vector.broadcast %c96_i32 : i32 to vector<64x128xi32>
    %58 = arith.cmpi slt, %29, %57 : vector<64x128xi32>
    %59 = arith.andi %56, %58 : vector<64x128xi1>
    %cst_23 = arith.constant 0xFF800000 : f32
    %60 = vector.broadcast %cst_23 : f32 to vector<64x128xf32>
    %61 = arith.select %59, %28, %60 : vector<64x128xi1>, vector<64x128xf32>
    %cst_24 = arith.constant dense<0xFF800000> : vector<64xf32>
    %62 = vector.multi_reduction <maximumf>, %61, %cst_24 [1] : vector<64x128xf32> to vector<64xf32>
    %63 = vector.shape_cast %62 : vector<64xf32> to vector<64x1xf32>
    %64 = vector.shape_cast %63 : vector<64x1xf32> to vector<64x1xf32>
    %65 = vector.broadcast %64 : vector<64x1xf32> to vector<64x128xf32>
    %66 = arith.select %59, %65, %54 : vector<64x128xi1>, vector<64x128xf32>
    %c96_i32_25 = arith.constant 96 : i32
    %67 = vector.broadcast %c96_i32_25 : i32 to vector<64x128xi32>
    %68 = arith.cmpi sge, %29, %67 : vector<64x128xi32>
    %c128_i32 = arith.constant 128 : i32
    %69 = vector.broadcast %c128_i32 : i32 to vector<64x128xi32>
    %70 = arith.cmpi slt, %29, %69 : vector<64x128xi32>
    %71 = arith.andi %68, %70 : vector<64x128xi1>
    %cst_26 = arith.constant 0xFF800000 : f32
    %72 = vector.broadcast %cst_26 : f32 to vector<64x128xf32>
    %73 = arith.select %71, %28, %72 : vector<64x128xi1>, vector<64x128xf32>
    %cst_27 = arith.constant dense<0xFF800000> : vector<64xf32>
    %74 = vector.multi_reduction <maximumf>, %73, %cst_27 [1] : vector<64x128xf32> to vector<64xf32>
    %75 = vector.shape_cast %74 : vector<64xf32> to vector<64x1xf32>
    %76 = vector.shape_cast %75 : vector<64x1xf32> to vector<64x1xf32>
    %77 = vector.broadcast %76 : vector<64x1xf32> to vector<64x128xf32>
    %78 = arith.select %71, %77, %66 : vector<64x128xi1>, vector<64x128xf32>
    %79 = arith.subf %28, %78 : vector<64x128xf32>
    %80 = math.exp %79 : vector<64x128xf32>
    %c0_28 = arith.constant 0 : index
    %c384 = arith.constant 384 : index
    %81 = vector.load %arg2[%c0_28, %c384] : memref<128x896xf32, #tpu.memory_space<vmem>>, vector<128x256xf32>
    %cst_29 = arith.constant dense<0.000000e+00> : vector<64x256xf32>
    %82 = tpu.matmul %80, %81, %cst_29 {dimension_numbers = #tpu.dot_dimension_numbers<[1], [0], [0], [1], [0, 0, 1, 1], [], []>} : vector<64x128xf32>, vector<128x256xf32>, vector<64x256xf32> -> vector<64x256xf32>
    %83 = vector.extract_strided_slice %82 {offsets = [0, 0], sizes = [64, 128], strides = [1, 1]} : vector<64x256xf32> to vector<64x128xf32>
    %84 = arith.mulf %83, %20 : vector<64x128xf32>
    %85 = vector.extract_strided_slice %82 {offsets = [0, 128], sizes = [64, 128], strides = [1, 1]} : vector<64x256xf32> to vector<64x128xf32>
    %86 = arith.divf %84, %85 : vector<64x128xf32>
    %c0_30 = arith.constant 0 : index
    %c640 = arith.constant 640 : index
    %87 = vector.load %arg2[%c0_30, %c640] : memref<128x896xf32, #tpu.memory_space<vmem>>, vector<128x16xf32>
    %cst_31 = arith.constant dense<0.000000e+00> : vector<64x16xf32>
    %88 = tpu.matmul %86, %87, %cst_31 {dimension_numbers = #tpu.dot_dimension_numbers<[1], [0], [0], [1], [0, 0, 1, 1], [], []>} : vector<64x128xf32>, vector<128x16xf32>, vector<64x16xf32> -> vector<64x16xf32>
    %89 = vector.broadcast %5 : vector<1x16xf32> to vector<64x16xf32>
    %90 = arith.addf %88, %89 : vector<64x16xf32>
    %c0_32 = arith.constant 0 : index
    %c0_33 = arith.constant 0 : index
    %91 = vector.load %arg4[%c0_32, %c0_33] : memref<64x16xf32, #tpu.memory_space<vmem>>, vector<64x16xf32>
    tpu.vector_store %arg4[%c0_32, %c0_33], %90 {strides = array<i32>} : memref<64x16xf32, #tpu.memory_space<vmem>>, vector<64x16xf32>,
    return
  }
}

</mosaic_0001>

<llo_original>
// kernel: mmha_forward.1
$region0: #{mmha_forward.1}
  #allocation0 [shape = 'u32[]', space=smem, size = 0x4, offset = 0x4, fixed_abs, tag = 'smem constant byte address 0x4 - core index']
  #allocation1 [shape = 'u32[72,128]{1,0:T(1,128)}', space=vmem, size = 0x9000, scoped, tag = 'internal scratch']
  %s0 = inlined_call_operand.vmem [shape: f32[64,1], index: 0, kind: input, shape index: {}]
  %s1 = inlined_call_operand.vmem [shape: f32[64,16], index: 1, kind: input, shape index: {}]
  %s2 = inlined_call_operand.hbm [shape: f32[128,896], index: 2, kind: input, shape index: {}]
  %s3 = inlined_call_operand.vmem [shape: f32[6,128], index: 3, kind: input, shape index: {}]
  %s4 = inlined_call_operand.vmem [shape: f32[64,16], index: 4, kind: output, shape index: {}]
  %s5 = sld [smem:[#allocation0]]
  $region30: #{mmha_forward.1} parent=0
    _
  %s7 = ssub.s32 1, %s5
  %s8 = scalar_select 0, %s7, %s5
  $region1: #{mmha_forward.1} parent=0
    #allocation2 [shape = 'u8[458752]{0}', space=vmem, size = 0x70000, scoped, tag = 'input window, operand 2, single buffered']
    #allocation3 [shape = 's32[1]{0}', space=sflag, size = 0x4, scoped, tag = 'scoped memory for mmha_forward.1']
    %9 = vsyncpa [#allocation3], 0
    // Predicated region
    $region2: #{mmha_forward.1} parent=1 // pred_check
      _
    $region3: #{mmha_forward.1} parent=1 // pred_check_branch
      %11 = sbr.rel (0) target = $region5
    $region4: #{mmha_forward.1} parent=1 // pred_region
      _
    $region5: #{mmha_forward.1} parent=1 // pred_fallthru
      _
    // Predicated region
    $region6: #{mmha_forward.1} parent=1 // pred_check
      _
    $region7: #{mmha_forward.1} parent=1 // pred_check_branch
      %13 = sbr.rel (0) target = $region9
    $region8: #{mmha_forward.1} parent=1 // pred_region
      _
    $region9: #{mmha_forward.1} parent=1 // pred_fallthru
      _
    // Predicated region
    $region10: #{mmha_forward.1} parent=1 // pred_check
      _
    $region11: #{mmha_forward.1} parent=1 // pred_check_branch
      %15 = sbr.rel (0) target = $region13
    $region12: #{mmha_forward.1} parent=1 // pred_region
      %17 = vsyncadd [#allocation3], 0
      %s18 = sshll.u32 %s2, 4
      %s19 = int_to_ptr.hbm [resolvable:$true] %s18
      %s20 = sshll.u32 [#allocation2], 4
      %s21 = int_to_ptr.vmem [resolvable:$true] %s20
      %26 = dma.hbm_to_vmem [thread:$0]  %s19, 14336, %s21, [#allocation3], 896, 896, 56
    $region13: #{mmha_forward.1} parent=1 // pred_fallthru
      _
    // Predicated region
    $region14: #{mmha_forward.1} parent=1 // pred_check
      _
    $region15: #{mmha_forward.1} parent=1 // pred_check_branch
      %28 = sbr.rel (0) target = $region17
    $region16: #{mmha_forward.1} parent=1 // pred_region
      _
    $region17: #{mmha_forward.1} parent=1 // pred_fallthru
      _
    // Predicated region
    $region18: #{mmha_forward.1} parent=1 // pred_check
      _
    $region19: #{mmha_forward.1} parent=1 // pred_check_branch
      %30 = sbr.rel (0) target = $region21
    $region20: #{mmha_forward.1} parent=1 // pred_region
      %32 = dma.done [#allocation3], 14336
    $region21: #{mmha_forward.1} parent=1 // pred_fallthru
      _
    %v33 = vld [vmem:[%s3] sm:$0x1]
    %v34 = vld [vmem:[%s3 + $0x1] sm:$0x1]
    %v35 = vld [vmem:[%s3 + $0x2] sm:$0x1]
    %v36 = vld [vmem:[%s3 + $0x3] sm:$0x1]
    %v37 = vld [vmem:[%s3 + $0x4] sm:$0x1]
    %v38 = vld [vmem:[%s3 + $0x5] sm:$0x1]
    %v39 = vld [vmem:[%s0] sm:$0xff]
    %v40 = vld [vmem:[%s0 + $0x8] sm:$0xff]
    %v41 = vld [vmem:[%s0 + $0x10] sm:$0xff]
    %v42 = vld [vmem:[%s0 + $0x18] sm:$0xff]
    %v43 = vld [vmem:[%s0 + $0x20] sm:$0xff]
    %v44 = vld [vmem:[%s0 + $0x28] sm:$0xff]
    %v45 = vld [vmem:[%s0 + $0x30] sm:$0xff]
    %v46 = vld [vmem:[%s0 + $0x38] sm:$0xff]
    %48 = vset.pattern.permute.xlu0 0
    %49 = vperm.xlu0 %48, %v39
    %v50 = vpop.permute.xlu0 %49
    %53 = vset.pattern.permute.xlu0 0
    %54 = vperm.xlu0 %53, %v40
    %v55 = vpop.permute.xlu0 %54
    %58 = vset.pattern.permute.xlu0 0
    %59 = vperm.xlu0 %58, %v41
    %v60 = vpop.permute.xlu0 %59
    %63 = vset.pattern.permute.xlu0 0
    %64 = vperm.xlu0 %63, %v42
    %v65 = vpop.permute.xlu0 %64
    %68 = vset.pattern.permute.xlu0 0
    %69 = vperm.xlu0 %68, %v43
    %v70 = vpop.permute.xlu0 %69
    %73 = vset.pattern.permute.xlu0 0
    %74 = vperm.xlu0 %73, %v44
    %v75 = vpop.permute.xlu0 %74
    %78 = vset.pattern.permute.xlu0 0
    %79 = vperm.xlu0 %78, %v45
    %v80 = vpop.permute.xlu0 %79
    %83 = vset.pattern.permute.xlu0 0
    %84 = vperm.xlu0 %83, %v46
    %v85 = vpop.permute.xlu0 %84
    %v87 = vperm.slane %v33, 0
    %v88 = vmul.f32 %v50, %v87
    %v89 = vmul.f32 %v55, %v87
    %v90 = vmul.f32 %v60, %v87
    %v91 = vmul.f32 %v65, %v87
    %v92 = vmul.f32 %v70, %v87
    %v93 = vmul.f32 %v75, %v87
    %v94 = vmul.f32 %v80, %v87
    %v95 = vmul.f32 %v85, %v87
    %v96 = vperm.slane %v34, 0
    %v97 = vadd.f32 %v88, %v96
    %v98 = vadd.f32 %v89, %v96
    %v99 = vadd.f32 %v90, %v96
    %v100 = vadd.f32 %v91, %v96
    %v101 = vadd.f32 %v92, %v96
    %v102 = vadd.f32 %v93, %v96
    %v103 = vadd.f32 %v94, %v96
    %v104 = vadd.f32 %v95, %v96
    %v105 = vand.u32 2147483647, %v97
    %vm106 = vcmp.le.f32.partialorder %v105, 0.7853982
    %vm107 = vcmp.lt.s32.totalorder %v97, 0
    %v108 = vand.u32 %v97, 2139095040
    %v109 = vshrl.u32 %v108, 23
    %v110 = vsub.s32 %v109, 127
    %v111 = vand.u32 2147483647, %v97
    %v112 = vand.u32 %v111, 8388607
    %v113 = vor.u32 %v112, 8388608
    %v114 = vsub.s32 0, %v113
    %v115 = vadd.s32 %v110, 1
    %vm116 = vcmp.gt.s32.totalorder %v115, 0
    %v117 = vsel %vm116, %v115, 0
    %v118 = vshrl.u32 %v117, 5
    %v119 = vand.u32 %v117, 31
    %v120 = vsub.s32 32, %v119
    %v121 = vshrl.u32 683565275, %v120
    %v122 = vshll.u32 683565275, %v119
    %v123 = vshrl.u32 2475754826, %v120
    %v124 = vor.u32 %v122, %v123
    %v125 = vshll.u32 2475754826, %v119
    %v126 = vshrl.u32 2131351028, %v120
    %v127 = vor.u32 %v125, %v126
    %v128 = vshll.u32 2131351028, %v119
    %v129 = vshrl.u32 2102212464, %v120
    %v130 = vor.u32 %v128, %v129
    %v131 = vshll.u32 2102212464, %v119
    %v132 = vshrl.u32 920167782, %v120
    %v133 = vor.u32 %v131, %v132
    %v134 = vshll.u32 920167782, %v119
    %v135 = vshrl.u32 1326507024, %v120
    %v136 = vor.u32 %v134, %v135
    %vm137 = vcmp.lt.s32.totalorder %v118, 1
    %vm138 = vcmp.lt.s32.totalorder %v118, 2
    %vm139 = vcmp.lt.s32.totalorder %v118, 3
    %vm140 = vcmp.lt.s32.totalorder %v118, 4
    %v141 = vsel %vm137, %v121, %v124
    %v142 = vsel %vm140, %v130, 2102212464
    %v143 = vsel %vm139, %v127, %v142
    %v144 = vsel %vm138, %v141, %v143
    %v145 = vsel %vm137, %v124, %v127
    %v146 = vsel %vm140, %v133, 920167782
    %v147 = vsel %vm139, %v130, %v146
    %v148 = vsel %vm138, %v145, %v147
    %v149 = vsel %vm137, %v127, %v130
    %v150 = vsel %vm140, %v136, 1326507024
    %v151 = vsel %vm139, %v133, %v150
    %v152 = vsel %vm138, %v149, %v151
    %v153 = vshll.u32 %v113, 8
    %v154 = vand.u32 %v153, 65535
    %v155 = vshrl.u32 %v153, 16
    %v156 = vand.u32 %v152, 65535
    %v157 = vshrl.u32 %v152, 16
    %v158 = vmul.u32 %v154, %v156
    %v159 = vmul.u32 %v154, %v157
    %v160 = vmul.u32 %v155, %v156
    %v161 = vmul.u32 %v155, %v157
    %v162 = vshll.u32 %v159, 16
    %v163 = vshrl.u32 %v159, 16
    %v164 = vshll.u32 %v160, 16
    %v165 = vshrl.u32 %v160, 16
    %vm166 = vc.u32 %v158, %v162
    %v167 = vsel %vm166, 1, 0
    %v168 = vadd.s32 %v158, %v162
    %v169 = vadd.s32 %v161, %v167
    %vm170 = vc.u32 %v168, %v164
    %v171 = vsel %vm170, 1, 0
    %v172 = vadd.s32 %v168, %v164
    %v173 = vadd.s32 %v169, %v171
    %v174 = vadd.s32 %v173, %v163
    %v175 = vadd.s32 %v174, %v165
    %v176 = vand.u32 %v153, 65535
    %v177 = vshrl.u32 %v153, 16
    %v178 = vand.u32 %v148, 65535
    %v179 = vshrl.u32 %v148, 16
    %v180 = vmul.u32 %v176, %v178
    %v181 = vmul.u32 %v176, %v179
    %v182 = vmul.u32 %v177, %v178
    %v183 = vmul.u32 %v177, %v179
    %v184 = vshll.u32 %v181, 16
    %v185 = vshrl.u32 %v181, 16
    %v186 = vshll.u32 %v182, 16
    %v187 = vshrl.u32 %v182, 16
    %vm188 = vc.u32 %v180, %v184
    %v189 = vsel %vm188, 1, 0
    %v190 = vadd.s32 %v180, %v184
    %v191 = vadd.s32 %v183, %v189
    %vm192 = vc.u32 %v190, %v186
    %v193 = vsel %vm192, 1, 0
    %v194 = vadd.s32 %v190, %v186
    %v195 = vadd.s32 %v191, %v193
    %v196 = vadd.s32 %v195, %v185
    %v197 = vadd.s32 %v196, %v187
    %v198 = vmul.u32 %v153, %v144
    %v199 = vadd.s32 %v175, %v194
    %vm200 = vc.u32 %v175, %v194
    %v201 = vadd.s32 %v197, 1
    %v202 = vsel %vm200, %v201, %v197
    %v203 = vadd.s32 %v198, %v202
    %v204 = vadd.s32 %v203, 536870912
    %v205 = vshrl.u32 %v204, 30
    %v206 = vshll.u32 %v205, 30
    %v207 = vsub.s32 %v203, %v206
    %vm208 = vcmp.lt.s32.totalorder %v207, 0
    %v209 = vsub.s32 0, %v207
    %v210 = vsel %vm208, %v209, %v207
    %v211 = vclz %v210
    %v212 = vsub.s32 %v211, 2
    %vm213 = vcmp.gt.s32.totalorder 0, %v212
    %v214 = vsel %vm213, 0, %v212
    %v215 = vsub.s32 32, %v214
    %v216 = vshll.u32 %v207, %v214
    %v217 = vshrl.u32 %v199, %v215
    %v218 = vor.u32 %v216, %v217
    %v219 = vsub.s32 4294967266, %v214
    %v220 = vadd.s32 %v219, 127
    %v221 = vshll.u32 %v220, 23
    %v222 = vor.u32 4788187, %v221
    %v223 = vand.u32 2147483647, %v222
    %v225 = vcvt.s32.f32 %v218
    %v226 = vmul.f32 %v225, %v223
    %v227 = vxor.u32 %v226, 2147483648
    %v228 = vsel %vm107, %v227, %v226
    %v229 = vsub.s32 4, %v205
    %v230 = vsel %vm107, %v229, %v205
    %v231 = vsel %vm106, %v97, %v228
    %v232 = vsel %vm106, 0, %v230
    %v233 = vmul.f32 %v231, %v231
    %v234 = vmul.f32 %v233, -0.001358992
    %v235 = vadd.f32 %v234, 0.041655596
    %v236 = vmul.f32 %v233, %v235
    %v237 = vadd.f32 %v236, -0.4999988
    %v238 = vmul.f32 %v233, %v237
    %v239 = vadd.f32 1.0, %v238
    %v240 = vmul.f32 %v231, %v231
    %v241 = vmul.f32 %v240, -0.00019511016
    %v242 = vadd.f32 %v241, 0.008332121
    %v243 = vmul.f32 %v240, %v242
    %v244 = vadd.f32 %v243, -0.16666654
    %v245 = vmul.f32 %v240, %v244
    %v246 = vadd.f32 %v245, 1.0
    %v247 = vmul.f32 %v246, %v231
    %vm248 = vweird.f32 %v97
    %v249 = vadd.s32 %v232, 3
    %v250 = vand.u32 %v249, 3
    %vm251 = vcmp.lt.s32.totalorder %v250, 2
    %vm252 = vcmp.eq.s32.totalorder %v250, 0
    %v253 = vxor.u32 %v247, 2147483648
    %v254 = vsel %vm252, %v239, %v253
    %vm255 = vcmp.eq.s32.totalorder %v250, 2
    %v256 = vxor.u32 %v239, 2147483648
    %v257 = vsel %vm255, %v256, %v247
    %v258 = vsel %vm251, %v254, %v257
    %v259 = vsel %vm248, nan, %v258
    %v260 = vand.u32 2147483647, %v98
    %vm261 = vcmp.le.f32.partialorder %v260, 0.7853982
    %vm262 = vcmp.lt.s32.totalorder %v98, 0
    %v263 = vand.u32 %v98, 2139095040
    %v264 = vshrl.u32 %v263, 23
    %v265 = vsub.s32 %v264, 127
    %v266 = vand.u32 2147483647, %v98
    %v267 = vand.u32 %v266, 8388607
    %v268 = vor.u32 %v267, 8388608
    %v269 = vsub.s32 0, %v268
    %v270 = vadd.s32 %v265, 1
    %vm271 = vcmp.gt.s32.totalorder %v270, 0
    %v272 = vsel %vm271, %v270, 0
    %v273 = vshrl.u32 %v272, 5
    %v274 = vand.u32 %v272, 31
    %v275 = vsub.s32 32, %v274
    %v276 = vshrl.u32 683565275, %v275
    %v277 = vshll.u32 683565275, %v274
    %v278 = vshrl.u32 2475754826, %v275
    %v279 = vor.u32 %v277, %v278
    %v280 = vshll.u32 2475754826, %v274
    %v281 = vshrl.u32 2131351028, %v275
    %v282 = vor.u32 %v280, %v281
    %v283 = vshll.u32 2131351028, %v274
    %v284 = vshrl.u32 2102212464, %v275
    %v285 = vor.u32 %v283, %v284
    %v286 = vshll.u32 2102212464, %v274
    %v287 = vshrl.u32 920167782, %v275
    %v288 = vor.u32 %v286, %v287
    %v289 = vshll.u32 920167782, %v274
    %v290 = vshrl.u32 1326507024, %v275
    %v291 = vor.u32 %v289, %v290
    %vm292 = vcmp.lt.s32.totalorder %v273, 1
    %vm293 = vcmp.lt.s32.totalorder %v273, 2
    %vm294 = vcmp.lt.s32.totalorder %v273, 3
    %vm295 = vcmp.lt.s32.totalorder %v273, 4
    %v296 = vsel %vm292, %v276, %v279
    %v297 = vsel %vm295, %v285, 2102212464
    %v298 = vsel %vm294, %v282, %v297
    %v299 = vsel %vm293, %v296, %v298
    %v300 = vsel %vm292, %v279, %v282
    %v301 = vsel %vm295, %v288, 920167782
    %v302 = vsel %vm294, %v285, %v301
    %v303 = vsel %vm293, %v300, %v302
    %v304 = vsel %vm292, %v282, %v285
    %v305 = vsel %vm295, %v291, 1326507024
    %v306 = vsel %vm294, %v288, %v305
    %v307 = vsel %vm293, %v304, %v306
    %v308 = vshll.u32 %v268, 8
    %v309 = vand.u32 %v308, 65535
    %v310 = vshrl.u32 %v308, 16
    %v311 = vand.u32 %v307, 65535
    %v312 = vshrl.u32 %v307, 16
    %v313 = vmul.u32 %v309, %v311
    %v314 = vmul.u32 %v309, %v312
    %v315 = vmul.u32 %v310, %v311
    %v316 = vmul.u32 %v310, %v312
    %v317 = vshll.u32 %v314, 16
    %v318 = vshrl.u32 %v314, 16
    %v319 = vshll.u32 %v315, 16
    %v320 = vshrl.u32 %v315, 16
    %vm321 = vc.u32 %v313, %v317
    %v322 = vsel %vm321, 1, 0
    %v323 = vadd.s32 %v313, %v317
    %v324 = vadd.s32 %v316, %v322
    %vm325 = vc.u32 %v323, %v319
    %v326 = vsel %vm325, 1, 0
    %v327 = vadd.s32 %v323, %v319
    %v328 = vadd.s32 %v324, %v326
    %v329 = vadd.s32 %v328, %v318
    %v330 = vadd.s32 %v329, %v320
    %v331 = vand.u32 %v308, 65535
    %v332 = vshrl.u32 %v308, 16
    %v333 = vand.u32 %v303, 65535
    %v334 = vshrl.u32 %v303, 16
    %v335 = vmul.u32 %v331, %v333
    %v336 = vmul.u32 %v331, %v334
    %v337 = vmul.u32 %v332, %v333
    %v338 = vmul.u32 %v332, %v334
    %v339 = vshll.u32 %v336, 16
    %v340 = vshrl.u32 %v336, 16
    %v341 = vshll.u32 %v337, 16
    %v342 = vshrl.u32 %v337, 16
    %vm343 = vc.u32 %v335, %v339
    %v344 = vsel %vm343, 1, 0
    %v345 = vadd.s32 %v335, %v339
    %v346 = vadd.s32 %v338, %v344
    %vm347 = vc.u32 %v345, %v341
    %v348 = vsel %vm347, 1, 0
    %v349 = vadd.s32 %v345, %v341
    %v350 = vadd.s32 %v346, %v348
    %v351 = vadd.s32 %v350, %v340
    %v352 = vadd.s32 %v351, %v342
    %v353 = vmul.u32 %v308, %v299
    %v354 = vadd.s32 %v330, %v349
    %vm355 = vc.u32 %v330, %v349
    %v356 = vadd.s32 %v352, 1
    %v357 = vsel %vm355, %v356, %v352
    %v358 = vadd.s32 %v353, %v357
    %v359 = vadd.s32 %v358, 536870912
    %v360 = vshrl.u32 %v359, 30
    %v361 = vshll.u32 %v360, 30
    %v362 = vsub.s32 %v358, %v361
    %vm363 = vcmp.lt.s32.totalorder %v362, 0
    %v364 = vsub.s32 0, %v362
    %v365 = vsel %vm363, %v364, %v362
    %v366 = vclz %v365
    %v367 = vsub.s32 %v366, 2
    %vm368 = vcmp.gt.s32.totalorder 0, %v367
    %v369 = vsel %vm368, 0, %v367
    %v370 = vsub.s32 32, %v369
    %v371 = vshll.u32 %v362, %v369
    %v372 = vshrl.u32 %v354, %v370
    %v373 = vor.u32 %v371, %v372
    %v374 = vsub.s32 4294967266, %v369
    %v375 = vadd.s32 %v374, 127
    %v376 = vshll.u32 %v375, 23
    %v377 = vor.u32 4788187, %v376
    %v378 = vand.u32 2147483647, %v377
    %v380 = vcvt.s32.f32 %v373
    %v381 = vmul.f32 %v380, %v378
    %v382 = vxor.u32 %v381, 2147483648
    %v383 = vsel %vm262, %v382, %v381
    %v384 = vsub.s32 4, %v360
    %v385 = vsel %vm262, %v384, %v360
    %v386 = vsel %vm261, %v98, %v383
    %v387 = vsel %vm261, 0, %v385
    %v388 = vmul.f32 %v386, %v386
    %v389 = vmul.f32 %v388, -0.001358992
    %v390 = vadd.f32 %v389, 0.041655596
    %v391 = vmul.f32 %v388, %v390
    %v392 = vadd.f32 %v391, -0.4999988
    %v393 = vmul.f32 %v388, %v392
    %v394 = vadd.f32 1.0, %v393
    %v395 = vmul.f32 %v386, %v386
    %v396 = vmul.f32 %v395, -0.00019511016
    %v397 = vadd.f32 %v396, 0.008332121
    %v398 = vmul.f32 %v395, %v397
    %v399 = vadd.f32 %v398, -0.16666654
    %v400 = vmul.f32 %v395, %v399
    %v401 = vadd.f32 %v400, 1.0
    %v402 = vmul.f32 %v401, %v386
    %vm403 = vweird.f32 %v98
    %v404 = vadd.s32 %v387, 3
    %v405 = vand.u32 %v404, 3
    %vm406 = vcmp.lt.s32.totalorder %v405, 2
    %vm407 = vcmp.eq.s32.totalorder %v405, 0
    %v408 = vxor.u32 %v402, 2147483648
    %v409 = vsel %vm407, %v394, %v408
    %vm410 = vcmp.eq.s32.totalorder %v405, 2
    %v411 = vxor.u32 %v394, 2147483648
    %v412 = vsel %vm410, %v411, %v402
    %v413 = vsel %vm406, %v409, %v412
    %v414 = vsel %vm403, nan, %v413
    %v415 = vand.u32 2147483647, %v99
    %vm416 = vcmp.le.f32.partialorder %v415, 0.7853982
    %vm417 = vcmp.lt.s32.totalorder %v99, 0
    %v418 = vand.u32 %v99, 2139095040
    %v419 = vshrl.u32 %v418, 23
    %v420 = vsub.s32 %v419, 127
    %v421 = vand.u32 2147483647, %v99
    %v422 = vand.u32 %v421, 8388607
    %v423 = vor.u32 %v422, 8388608
    %v424 = vsub.s32 0, %v423
    %v425 = vadd.s32 %v420, 1
    %vm426 = vcmp.gt.s32.totalorder %v425, 0
    %v427 = vsel %vm426, %v425, 0
    %v428 = vshrl.u32 %v427, 5
    %v429 = vand.u32 %v427, 31
    %v430 = vsub.s32 32, %v429
    %v431 = vshrl.u32 683565275, %v430
    %v432 = vshll.u32 683565275, %v429
    %v433 = vshrl.u32 2475754826, %v430
    %v434 = vor.u32 %v432, %v433
    %v435 = vshll.u32 2475754826, %v429
    %v436 = vshrl.u32 2131351028, %v430
    %v437 = vor.u32 %v435, %v436
    %v438 = vshll.u32 2131351028, %v429
    %v439 = vshrl.u32 2102212464, %v430
    %v440 = vor.u32 %v438, %v439
    %v441 = vshll.u32 2102212464, %v429
    %v442 = vshrl.u32 920167782, %v430
    %v443 = vor.u32 %v441, %v442
    %v444 = vshll.u32 920167782, %v429
    %v445 = vshrl.u32 1326507024, %v430
    %v446 = vor.u32 %v444, %v445
    %vm447 = vcmp.lt.s32.totalorder %v428, 1
    %vm448 = vcmp.lt.s32.totalorder %v428, 2
    %vm449 = vcmp.lt.s32.totalorder %v428, 3
    %vm450 = vcmp.lt.s32.totalorder %v428, 4
    %v451 = vsel %vm447, %v431, %v434
    %v452 = vsel %vm450, %v440, 2102212464
    %v453 = vsel %vm449, %v437, %v452
    %v454 = vsel %vm448, %v451, %v453
    %v455 = vsel %vm447, %v434, %v437
    %v456 = vsel %vm450, %v443, 920167782
    %v457 = vsel %vm449, %v440, %v456
    %v458 = vsel %vm448, %v455, %v457
    %v459 = vsel %vm447, %v437, %v440
    %v460 = vsel %vm450, %v446, 1326507024
    %v461 = vsel %vm449, %v443, %v460
    %v462 = vsel %vm448, %v459, %v461
    %v463 = vshll.u32 %v423, 8
    %v464 = vand.u32 %v463, 65535
    %v465 = vshrl.u32 %v463, 16
    %v466 = vand.u32 %v462, 65535
    %v467 = vshrl.u32 %v462, 16
    %v468 = vmul.u32 %v464, %v466
    %v469 = vmul.u32 %v464, %v467
    %v470 = vmul.u32 %v465, %v466
    %v471 = vmul.u32 %v465, %v467
    %v472 = vshll.u32 %v469, 16
    %v473 = vshrl.u32 %v469, 16
    %v474 = vshll.u32 %v470, 16
    %v475 = vshrl.u32 %v470, 16
    %vm476 = vc.u32 %v468, %v472
    %v477 = vsel %vm476, 1, 0
    %v478 = vadd.s32 %v468, %v472
    %v479 = vadd.s32 %v471, %v477
    %vm480 = vc.u32 %v478, %v474
    %v481 = vsel %vm480, 1, 0
    %v482 = vadd.s32 %v478, %v474
    %v483 = vadd.s32 %v479, %v481
    %v484 = vadd.s32 %v483, %v473
    %v485 = vadd.s32 %v484, %v475
    %v486 = vand.u32 %v463, 65535
    %v487 = vshrl.u32 %v463, 16
    %v488 = vand.u32 %v458, 65535
    %v489 = vshrl.u32 %v458, 16
    %v490 = vmul.u32 %v486, %v488
    %v491 = vmul.u32 %v486, %v489
    %v492 = vmul.u32 %v487, %v488
    %v493 = vmul.u32 %v487, %v489
    %v494 = vshll.u32 %v491, 16
    %v495 = vshrl.u32 %v491, 16
    %v496 = vshll.u32 %v492, 16
    %v497 = vshrl.u32 %v492, 16
    %vm498 = vc.u32 %v490, %v494
    %v499 = vsel %vm498, 1, 0
    %v500 = vadd.s32 %v490, %v494
    %v501 = vadd.s32 %v493, %v499
    %vm502 = vc.u32 %v500, %v496
    %v503 = vsel %vm502, 1, 0
    %v504 = vadd.s32 %v500, %v496
    %v505 = vadd.s32 %v501, %v503
    %v506 = vadd.s32 %v505, %v495
    %v507 = vadd.s32 %v506, %v497
    %v508 = vmul.u32 %v463, %v454
    %v509 = vadd.s32 %v485, %v504
    %vm510 = vc.u32 %v485, %v504
    %v511 = vadd.s32 %v507, 1
    %v512 = vsel %vm510, %v511, %v507
    %v513 = vadd.s32 %v508, %v512
    %v514 = vadd.s32 %v513, 536870912
    %v515 = vshrl.u32 %v514, 30
    %v516 = vshll.u32 %v515, 30
    %v517 = vsub.s32 %v513, %v516
    %vm518 = vcmp.lt.s32.totalorder %v517, 0
    %v519 = vsub.s32 0, %v517
    %v520 = vsel %vm518, %v519, %v517
    %v521 = vclz %v520
    %v522 = vsub.s32 %v521, 2
    %vm523 = vcmp.gt.s32.totalorder 0, %v522
    %v524 = vsel %vm523, 0, %v522
    %v525 = vsub.s32 32, %v524
    %v526 = vshll.u32 %v517, %v524
    %v527 = vshrl.u32 %v509, %v525
    %v528 = vor.u32 %v526, %v527
    %v529 = vsub.s32 4294967266, %v524
    %v530 = vadd.s32 %v529, 127
    %v531 = vshll.u32 %v530, 23
    %v532 = vor.u32 4788187, %v531
    %v533 = vand.u32 2147483647, %v532
    %v535 = vcvt.s32.f32 %v528
    %v536 = vmul.f32 %v535, %v533
    %v537 = vxor.u32 %v536, 2147483648
    %v538 = vsel %vm417, %v537, %v536
    %v539 = vsub.s32 4, %v515
    %v540 = vsel %vm417, %v539, %v515
    %v541 = vsel %vm416, %v99, %v538
    %v542 = vsel %vm416, 0, %v540
    %v543 = vmul.f32 %v541, %v541
    %v544 = vmul.f32 %v543, -0.001358992
    %v545 = vadd.f32 %v544, 0.041655596
    %v546 = vmul.f32 %v543, %v545
    %v547 = vadd.f32 %v546, -0.4999988
    %v548 = vmul.f32 %v543, %v547
    %v549 = vadd.f32 1.0, %v548
    %v550 = vmul.f32 %v541, %v541
    %v551 = vmul.f32 %v550, -0.00019511016
    %v552 = vadd.f32 %v551, 0.008332121
    %v553 = vmul.f32 %v550, %v552
    %v554 = vadd.f32 %v553, -0.16666654
    %v555 = vmul.f32 %v550, %v554
    %v556 = vadd.f32 %v555, 1.0
    %v557 = vmul.f32 %v556, %v541
    %vm558 = vweird.f32 %v99
    %v559 = vadd.s32 %v542, 3
    %v560 = vand.u32 %v559, 3
    %vm561 = vcmp.lt.s32.totalorder %v560, 2
    %vm562 = vcmp.eq.s32.totalorder %v560, 0
    %v563 = vxor.u32 %v557, 2147483648
    %v564 = vsel %vm562, %v549, %v563
    %vm565 = vcmp.eq.s32.totalorder %v560, 2
    %v566 = vxor.u32 %v549, 2147483648
    %v567 = vsel %vm565, %v566, %v557
    %v568 = vsel %vm561, %v564, %v567
    %v569 = vsel %vm558, nan, %v568
    %v570 = vand.u32 2147483647, %v100
    %vm571 = vcmp.le.f32.partialorder %v570, 0.7853982
    %vm572 = vcmp.lt.s32.totalorder %v100, 0
    %v573 = vand.u32 %v100, 2139095040
    %v574 = vshrl.u32 %v573, 23
    %v575 = vsub.s32 %v574, 127
    %v576 = vand.u32 2147483647, %v100
    %v577 = vand.u32 %v576, 8388607
    %v578 = vor.u32 %v577, 8388608
    %v579 = vsub.s32 0, %v578
    %v580 = vadd.s32 %v575, 1
    %vm581 = vcmp.gt.s32.totalorder %v580, 0
    %v582 = vsel %vm581, %v580, 0
    %v583 = vshrl.u32 %v582, 5
    %v584 = vand.u32 %v582, 31
    %v585 = vsub.s32 32, %v584
    %v586 = vshrl.u32 683565275, %v585
    %v587 = vshll.u32 683565275, %v584
    %v588 = vshrl.u32 2475754826, %v585
    %v589 = vor.u32 %v587, %v588
    %v590 = vshll.u32 2475754826, %v584
    %v591 = vshrl.u32 2131351028, %v585
    %v592 = vor.u32 %v590, %v591
    %v593 = vshll.u32 2131351028, %v584
    %v594 = vshrl.u32 2102212464, %v585
    %v595 = vor.u32 %v593, %v594
    %v596 = vshll.u32 2102212464, %v584
    %v597 = vshrl.u32 920167782, %v585
    %v598 = vor.u32 %v596, %v597
    %v599 = vshll.u32 920167782, %v584
    %v600 = vshrl.u32 1326507024, %v585
    %v601 = vor.u32 %v599, %v600
    %vm602 = vcmp.lt.s32.totalorder %v583, 1
    %vm603 = vcmp.lt.s32.totalorder %v583, 2
    %vm604 = vcmp.lt.s32.totalorder %v583, 3
    %vm605 = vcmp.lt.s32.totalorder %v583, 4
    %v606 = vsel %vm602, %v586, %v589
    %v607 = vsel %vm605, %v595, 2102212464
    %v608 = vsel %vm604, %v592, %v607
    %v609 = vsel %vm603, %v606, %v608
    %v610 = vsel %vm602, %v589, %v592
    %v611 = vsel %vm605, %v598, 920167782
    %v612 = vsel %vm604, %v595, %v611
    %v613 = vsel %vm603, %v610, %v612
    %v614 = vsel %vm602, %v592, %v595
    %v615 = vsel %vm605, %v601, 1326507024
    %v616 = vsel %vm604, %v598, %v615
    %v617 = vsel %vm603, %v614, %v616
    %v618 = vshll.u32 %v578, 8
    %v619 = vand.u32 %v618, 65535
    %v620 = vshrl.u32 %v618, 16
    %v621 = vand.u32 %v617, 65535
    %v622 = vshrl.u32 %v617, 16
    %v623 = vmul.u32 %v619, %v621
    %v624 = vmul.u32 %v619, %v622
    %v625 = vmul.u32 %v620, %v621
    %v626 = vmul.u32 %v620, %v622
    %v627 = vshll.u32 %v624, 16
    %v628 = vshrl.u32 %v624, 16
    %v629 = vshll.u32 %v625, 16
    %v630 = vshrl.u32 %v625, 16
    %vm631 = vc.u32 %v623, %v627
    %v632 = vsel %vm631, 1, 0
    %v633 = vadd.s32 %v623, %v627
    %v634 = vadd.s32 %v626, %v632
    %vm635 = vc.u32 %v633, %v629
    %v636 = vsel %vm635, 1, 0
    %v637 = vadd.s32 %v633, %v629
    %v638 = vadd.s32 %v634, %v636
    %v639 = vadd.s32 %v638, %v628
    %v640 = vadd.s32 %v639, %v630
    %v641 = vand.u32 %v618, 65535
    %v642 = vshrl.u32 %v618, 16
    %v643 = vand.u32 %v613, 65535
    %v644 = vshrl.u32 %v613, 16
    %v645 = vmul.u32 %v641, %v643
    %v646 = vmul.u32 %v641, %v644
    %v647 = vmul.u32 %v642, %v643
    %v648 = vmul.u32 %v642, %v644
    %v649 = vshll.u32 %v646, 16
    %v650 = vshrl.u32 %v646, 16
    %v651 = vshll.u32 %v647, 16
    %v652 = vshrl.u32 %v647, 16
    %vm653 = vc.u32 %v645, %v649
    %v654 = vsel %vm653, 1, 0
    %v655 = vadd.s32 %v645, %v649
    %v656 = vadd.s32 %v648, %v654
    %vm657 = vc.u32 %v655, %v651
    %v658 = vsel %vm657, 1, 0
    %v659 = vadd.s32 %v655, %v651
    %v660 = vadd.s32 %v656, %v658
    %v661 = vadd.s32 %v660, %v650
    %v662 = vadd.s32 %v661, %v652
    %v663 = vmul.u32 %v618, %v609
    %v664 = vadd.s32 %v640, %v659
    %vm665 = vc.u32 %v640, %v659
    %v666 = vadd.s32 %v662, 1
    %v667 = vsel %vm665, %v666, %v662
    %v668 = vadd.s32 %v663, %v667
    %v669 = vadd.s32 %v668, 536870912
    %v670 = vshrl.u32 %v669, 30
    %v671 = vshll.u32 %v670, 30
    %v672 = vsub.s32 %v668, %v671
    %vm673 = vcmp.lt.s32.totalorder %v672, 0
    %v674 = vsub.s32 0, %v672
    %v675 = vsel %vm673, %v674, %v672
    %v676 = vclz %v675
    %v677 = vsub.s32 %v676, 2
    %vm678 = vcmp.gt.s32.totalorder 0, %v677
    %v679 = vsel %vm678, 0, %v677
    %v680 = vsub.s32 32, %v679
    %v681 = vshll.u32 %v672, %v679
    %v682 = vshrl.u32 %v664, %v680
    %v683 = vor.u32 %v681, %v682
    %v684 = vsub.s32 4294967266, %v679
    %v685 = vadd.s32 %v684, 127
    %v686 = vshll.u32 %v685, 23
    %v687 = vor.u32 4788187, %v686
    %v688 = vand.u32 2147483647, %v687
    %v690 = vcvt.s32.f32 %v683
    %v691 = vmul.f32 %v690, %v688
    %v692 = vxor.u32 %v691, 2147483648
    %v693 = vsel %vm572, %v692, %v691
    %v694 = vsub.s32 4, %v670
    %v695 = vsel %vm572, %v694, %v670
    %v696 = vsel %vm571, %v100, %v693
    %v697 = vsel %vm571, 0, %v695
    %v698 = vmul.f32 %v696, %v696
    %v699 = vmul.f32 %v698, -0.001358992
    %v700 = vadd.f32 %v699, 0.041655596
    %v701 = vmul.f32 %v698, %v700
    %v702 = vadd.f32 %v701, -0.4999988
    %v703 = vmul.f32 %v698, %v702
    %v704 = vadd.f32 1.0, %v703
    %v705 = vmul.f32 %v696, %v696
    %v706 = vmul.f32 %v705, -0.00019511016
    %v707 = vadd.f32 %v706, 0.008332121
    %v708 = vmul.f32 %v705, %v707
    %v709 = vadd.f32 %v708, -0.16666654
    %v710 = vmul.f32 %v705, %v709
    %v711 = vadd.f32 %v710, 1.0
    %v712 = vmul.f32 %v711, %v696
    %vm713 = vweird.f32 %v100
    %v714 = vadd.s32 %v697, 3
    %v715 = vand.u32 %v714, 3
    %vm716 = vcmp.lt.s32.totalorder %v715, 2
    %vm717 = vcmp.eq.s32.totalorder %v715, 0
    %v718 = vxor.u32 %v712, 2147483648
    %v719 = vsel %vm717, %v704, %v718
    %vm720 = vcmp.eq.s32.totalorder %v715, 2
    %v721 = vxor.u32 %v704, 2147483648
    %v722 = vsel %vm720, %v721, %v712
    %v723 = vsel %vm716, %v719, %v722
    %v724 = vsel %vm713, nan, %v723
    %v725 = vand.u32 2147483647, %v101
    %vm726 = vcmp.le.f32.partialorder %v725, 0.7853982
    %vm727 = vcmp.lt.s32.totalorder %v101, 0
    %v728 = vand.u32 %v101, 2139095040
    %v729 = vshrl.u32 %v728, 23
    %v730 = vsub.s32 %v729, 127
    %v731 = vand.u32 2147483647, %v101
    %v732 = vand.u32 %v731, 8388607
    %v733 = vor.u32 %v732, 8388608
    %v734 = vsub.s32 0, %v733
    %v735 = vadd.s32 %v730, 1
    %vm736 = vcmp.gt.s32.totalorder %v735, 0
    %v737 = vsel %vm736, %v735, 0
    %v738 = vshrl.u32 %v737, 5
    %v739 = vand.u32 %v737, 31
    %v740 = vsub.s32 32, %v739
    %v741 = vshrl.u32 683565275, %v740
    %v742 = vshll.u32 683565275, %v739
    %v743 = vshrl.u32 2475754826, %v740
    %v744 = vor.u32 %v742, %v743
    %v745 = vshll.u32 2475754826, %v739
    %v746 = vshrl.u32 2131351028, %v740
    %v747 = vor.u32 %v745, %v746
    %v748 = vshll.u32 2131351028, %v739
    %v749 = vshrl.u32 2102212464, %v740
    %v750 = vor.u32 %v748, %v749
    %v751 = vshll.u32 2102212464, %v739
    %v752 = vshrl.u32 920167782, %v740
    %v753 = vor.u32 %v751, %v752
    %v754 = vshll.u32 920167782, %v739
    %v755 = vshrl.u32 1326507024, %v740
    %v756 = vor.u32 %v754, %v755
    %vm757 = vcmp.lt.s32.totalorder %v738, 1
    %vm758 = vcmp.lt.s32.totalorder %v738, 2
    %vm759 = vcmp.lt.s32.totalorder %v738, 3
    %vm760 = vcmp.lt.s32.totalorder %v738, 4
    %v761 = vsel %vm757, %v741, %v744
    %v762 = vsel %vm760, %v750, 2102212464
    %v763 = vsel %vm759, %v747, %v762
    %v764 = vsel %vm758, %v761, %v763
    %v765 = vsel %vm757, %v744, %v747
    %v766 = vsel %vm760, %v753, 920167782
    %v767 = vsel %vm759, %v750, %v766
    %v768 = vsel %vm758, %v765, %v767
    %v769 = vsel %vm757, %v747, %v750
    %v770 = vsel %vm760, %v756, 1326507024
    %v771 = vsel %vm759, %v753, %v770
    %v772 = vsel %vm758, %v769, %v771
    %v773 = vshll.u32 %v733, 8
    %v774 = vand.u32 %v773, 65535
    %v775 = vshrl.u32 %v773, 16
    %v776 = vand.u32 %v772, 65535
    %v777 = vshrl.u32 %v772, 16
    %v778 = vmul.u32 %v774, %v776
    %v779 = vmul.u32 %v774, %v777
    %v780 = vmul.u32 %v775, %v776
    %v781 = vmul.u32 %v775, %v777
    %v782 = vshll.u32 %v779, 16
    %v783 = vshrl.u32 %v779, 16
    %v784 = vshll.u32 %v780, 16
    %v785 = vshrl.u32 %v780, 16
    %vm786 = vc.u32 %v778, %v782
    %v787 = vsel %vm786, 1, 0
    %v788 = vadd.s32 %v778, %v782
    %v789 = vadd.s32 %v781, %v787
    %vm790 = vc.u32 %v788, %v784
    %v791 = vsel %vm790, 1, 0
    %v792 = vadd.s32 %v788, %v784
    %v793 = vadd.s32 %v789, %v791
    %v794 = vadd.s32 %v793, %v783
    %v795 = vadd.s32 %v794, %v785
    %v796 = vand.u32 %v773, 65535
    %v797 = vshrl.u32 %v773, 16
    %v798 = vand.u32 %v768, 65535
    %v799 = vshrl.u32 %v768, 16
    %v800 = vmul.u32 %v796, %v798
    %v801 = vmul.u32 %v796, %v799
    %v802 = vmul.u32 %v797, %v798
    %v803 = vmul.u32 %v797, %v799
    %v804 = vshll.u32 %v801, 16
    %v805 = vshrl.u32 %v801, 16
    %v806 = vshll.u32 %v802, 16
    %v807 = vshrl.u32 %v802, 16
    %vm808 = vc.u32 %v800, %v804
    %v809 = vsel %vm808, 1, 0
    %v810 = vadd.s32 %v800, %v804
    %v811 = vadd.s32 %v803, %v809
    %vm812 = vc.u32 %v810, %v806
    %v813 = vsel %vm812, 1, 0
    %v814 = vadd.s32 %v810, %v806
    %v815 = vadd.s32 %v811, %v813
    %v816 = vadd.s32 %v815, %v805
    %v817 = vadd.s32 %v816, %v807
    %v818 = vmul.u32 %v773, %v764
    %v819 = vadd.s32 %v795, %v814
    %vm820 = vc.u32 %v795, %v814
    %v821 = vadd.s32 %v817, 1
    %v822 = vsel %vm820, %v821, %v817
    %v823 = vadd.s32 %v818, %v822
    %v824 = vadd.s32 %v823, 536870912
    %v825 = vshrl.u32 %v824, 30
    %v826 = vshll.u32 %v825, 30
    %v827 = vsub.s32 %v823, %v826
    %vm828 = vcmp.lt.s32.totalorder %v827, 0
    %v829 = vsub.s32 0, %v827
    %v830 = vsel %vm828, %v829, %v827
    %v831 = vclz %v830
    %v832 = vsub.s32 %v831, 2
    %vm833 = vcmp.gt.s32.totalorder 0, %v832
    %v834 = vsel %vm833, 0, %v832
    %v835 = vsub.s32 32, %v834
    %v836 = vshll.u32 %v827, %v834
    %v837 = vshrl.u32 %v819, %v835
    %v838 = vor.u32 %v836, %v837
    %v839 = vsub.s32 4294967266, %v834
    %v840 = vadd.s32 %v839, 127
    %v841 = vshll.u32 %v840, 23
    %v842 = vor.u32 4788187, %v841
    %v843 = vand.u32 2147483647, %v842
    %v845 = vcvt.s32.f32 %v838
    %v846 = vmul.f32 %v845, %v843
    %v847 = vxor.u32 %v846, 2147483648
    %v848 = vsel %vm727, %v847, %v846
    %v849 = vsub.s32 4, %v825
    %v850 = vsel %vm727, %v849, %v825
    %v851 = vsel %vm726, %v101, %v848
    %v852 = vsel %vm726, 0, %v850
    %v853 = vmul.f32 %v851, %v851
    %v854 = vmul.f32 %v853, -0.001358992
    %v855 = vadd.f32 %v854, 0.041655596
    %v856 = vmul.f32 %v853, %v855
    %v857 = vadd.f32 %v856, -0.4999988
    %v858 = vmul.f32 %v853, %v857
    %v859 = vadd.f32 1.0, %v858
    %v860 = vmul.f32 %v851, %v851
    %v861 = vmul.f32 %v860, -0.00019511016
    %v862 = vadd.f32 %v861, 0.008332121
    %v863 = vmul.f32 %v860, %v862
    %v864 = vadd.f32 %v863, -0.16666654
    %v865 = vmul.f32 %v860, %v864
    %v866 = vadd.f32 %v865, 1.0
    %v867 = vmul.f32 %v866, %v851
    %vm868 = vweird.f32 %v101
    %v869 = vadd.s32 %v852, 3
    %v870 = vand.u32 %v869, 3
    %vm871 = vcmp.lt.s32.totalorder %v870, 2
    %vm872 = vcmp.eq.s32.totalorder %v870, 0
    %v873 = vxor.u32 %v867, 2147483648
    %v874 = vsel %vm872, %v859, %v873
    %vm875 = vcmp.eq.s32.totalorder %v870, 2
    %v876 = vxor.u32 %v859, 2147483648
    %v877 = vsel %vm875, %v876, %v867
    %v878 = vsel %vm871, %v874, %v877
    %v879 = vsel %vm868, nan, %v878
    %v880 = vand.u32 2147483647, %v102
    %vm881 = vcmp.le.f32.partialorder %v880, 0.7853982
    %vm882 = vcmp.lt.s32.totalorder %v102, 0
    %v883 = vand.u32 %v102, 2139095040
    %v884 = vshrl.u32 %v883, 23
    %v885 = vsub.s32 %v884, 127
    %v886 = vand.u32 2147483647, %v102
    %v887 = vand.u32 %v886, 8388607
    %v888 = vor.u32 %v887, 8388608
    %v889 = vsub.s32 0, %v888
    %v890 = vadd.s32 %v885, 1
    %vm891 = vcmp.gt.s32.totalorder %v890, 0
    %v892 = vsel %vm891, %v890, 0
    %v893 = vshrl.u32 %v892, 5
    %v894 = vand.u32 %v892, 31
    %v895 = vsub.s32 32, %v894
    %v896 = vshrl.u32 683565275, %v895
    %v897 = vshll.u32 683565275, %v894
    %v898 = vshrl.u32 2475754826, %v895
    %v899 = vor.u32 %v897, %v898
    %v900 = vshll.u32 2475754826, %v894
    %v901 = vshrl.u32 2131351028, %v895
    %v902 = vor.u32 %v900, %v901
    %v903 = vshll.u32 2131351028, %v894
    %v904 = vshrl.u32 2102212464, %v895
    %v905 = vor.u32 %v903, %v904
    %v906 = vshll.u32 2102212464, %v894
    %v907 = vshrl.u32 920167782, %v895
    %v908 = vor.u32 %v906, %v907
    %v909 = vshll.u32 920167782, %v894
    %v910 = vshrl.u32 1326507024, %v895
    %v911 = vor.u32 %v909, %v910
    %vm912 = vcmp.lt.s32.totalorder %v893, 1
    %vm913 = vcmp.lt.s32.totalorder %v893, 2
    %vm914 = vcmp.lt.s32.totalorder %v893, 3
    %vm915 = vcmp.lt.s32.totalorder %v893, 4
    %v916 = vsel %vm912, %v896, %v899
    %v917 = vsel %vm915, %v905, 2102212464
    %v918 = vsel %vm914, %v902, %v917
    %v919 = vsel %vm913, %v916, %v918
    %v920 = vsel %vm912, %v899, %v902
    %v921 = vsel %vm915, %v908, 920167782
    %v922 = vsel %vm914, %v905, %v921
    %v923 = vsel %vm913, %v920, %v922
    %v924 = vsel %vm912, %v902, %v905
    %v925 = vsel %vm915, %v911, 1326507024
    %v926 = vsel %vm914, %v908, %v925
    %v927 = vsel %vm913, %v924, %v926
    %v928 = vshll.u32 %v888, 8
    %v929 = vand.u32 %v928, 65535
    %v930 = vshrl.u32 %v928, 16
    %v931 = vand.u32 %v927, 65535
    %v932 = vshrl.u32 %v927, 16
    %v933 = vmul.u32 %v929, %v931
    %v934 = vmul.u32 %v929, %v932
    %v935 = vmul.u32 %v930, %v931
    %v936 = vmul.u32 %v930, %v932
    %v937 = vshll.u32 %v934, 16
    %v938 = vshrl.u32 %v934, 16
    %v939 = vshll.u32 %v935, 16
    %v940 = vshrl.u32 %v935, 16
    %vm941 = vc.u32 %v933, %v937
    %v942 = vsel %vm941, 1, 0
    %v943 = vadd.s32 %v933, %v937
    %v944 = vadd.s32 %v936, %v942
    %vm945 = vc.u32 %v943, %v939
    %v946 = vsel %vm945, 1, 0
    %v947 = vadd.s32 %v943, %v939
    %v948 = vadd.s32 %v944, %v946
    %v949 = vadd.s32 %v948, %v938
    %v950 = vadd.s32 %v949, %v940
    %v951 = vand.u32 %v928, 65535
    %v952 = vshrl.u32 %v928, 16
    %v953 = vand.u32 %v923, 65535
    %v954 = vshrl.u32 %v923, 16
    %v955 = vmul.u32 %v951, %v953
    %v956 = vmul.u32 %v951, %v954
    %v957 = vmul.u32 %v952, %v953
    %v958 = vmul.u32 %v952, %v954
    %v959 = vshll.u32 %v956, 16
    %v960 = vshrl.u32 %v956, 16
    %v961 = vshll.u32 %v957, 16
    %v962 = vshrl.u32 %v957, 16
    %vm963 = vc.u32 %v955, %v959
    %v964 = vsel %vm963, 1, 0
    %v965 = vadd.s32 %v955, %v959
    %v966 = vadd.s32 %v958, %v964
    %vm967 = vc.u32 %v965, %v961
    %v968 = vsel %vm967, 1, 0
    %v969 = vadd.s32 %v965, %v961
    %v970 = vadd.s32 %v966, %v968
    %v971 = vadd.s32 %v970, %v960
    %v972 = vadd.s32 %v971, %v962
    %v973 = vmul.u32 %v928, %v919
    %v974 = vadd.s32 %v950, %v969
    %vm975 = vc.u32 %v950, %v969
    %v976 = vadd.s32 %v972, 1
    %v977 = vsel %vm975, %v976, %v972
    %v978 = vadd.s32 %v973, %v977
    %v979 = vadd.s32 %v978, 536870912
    %v980 = vshrl.u32 %v979, 30
    %v981 = vshll.u32 %v980, 30
    %v982 = vsub.s32 %v978, %v981
    %vm983 = vcmp.lt.s32.totalorder %v982, 0
    %v984 = vsub.s32 0, %v982
    %v985 = vsel %vm983, %v984, %v982
    %v986 = vclz %v985
    %v987 = vsub.s32 %v986, 2
    %vm988 = vcmp.gt.s32.totalorder 0, %v987
    %v989 = vsel %vm988, 0, %v987
    %v990 = vsub.s32 32, %v989
    %v991 = vshll.u32 %v982, %v989
    %v992 = vshrl.u32 %v974, %v990
    %v993 = vor.u32 %v991, %v992
    %v994 = vsub.s32 4294967266, %v989
    %v995 = vadd.s32 %v994, 127
    %v996 = vshll.u32 %v995, 23
    %v997 = vor.u32 4788187, %v996
    %v998 = vand.u32 2147483647, %v997
    %v1000 = vcvt.s32.f32 %v993
    %v1001 = vmul.f32 %v1000, %v998
    %v1002 = vxor.u32 %v1001, 2147483648
    %v1003 = vsel %vm882, %v1002, %v1001
    %v1004 = vsub.s32 4, %v980
    %v1005 = vsel %vm882, %v1004, %v980
    %v1006 = vsel %vm881, %v102, %v1003
    %v1007 = vsel %vm881, 0, %v1005
    %v1008 = vmul.f32 %v1006, %v1006
    %v1009 = vmul.f32 %v1008, -0.001358992
    %v1010 = vadd.f32 %v1009, 0.041655596
    %v1011 = vmul.f32 %v1008, %v1010
    %v1012 = vadd.f32 %v1011, -0.4999988
    %v1013 = vmul.f32 %v1008, %v1012
    %v1014 = vadd.f32 1.0, %v1013
    %v1015 = vmul.f32 %v1006, %v1006
    %v1016 = vmul.f32 %v1015, -0.00019511016
    %v1017 = vadd.f32 %v1016, 0.008332121
    %v1018 = vmul.f32 %v1015, %v1017
    %v1019 = vadd.f32 %v1018, -0.16666654
    %v1020 = vmul.f32 %v1015, %v1019
    %v1021 = vadd.f32 %v1020, 1.0
    %v1022 = vmul.f32 %v1021, %v1006
    %vm1023 = vweird.f32 %v102
    %v1024 = vadd.s32 %v1007, 3
    %v1025 = vand.u32 %v1024, 3
    %vm1026 = vcmp.lt.s32.totalorder %v1025, 2
    %vm1027 = vcmp.eq.s32.totalorder %v1025, 0
    %v1028 = vxor.u32 %v1022, 2147483648
    %v1029 = vsel %vm1027, %v1014, %v1028
    %vm1030 = vcmp.eq.s32.totalorder %v1025, 2
    %v1031 = vxor.u32 %v1014, 2147483648
    %v1032 = vsel %vm1030, %v1031, %v1022
    %v1033 = vsel %vm1026, %v1029, %v1032
    %v1034 = vsel %vm1023, nan, %v1033
    %v1035 = vand.u32 2147483647, %v103
    %vm1036 = vcmp.le.f32.partialorder %v1035, 0.7853982
    %vm1037 = vcmp.lt.s32.totalorder %v103, 0
    %v1038 = vand.u32 %v103, 2139095040
    %v1039 = vshrl.u32 %v1038, 23
    %v1040 = vsub.s32 %v1039, 127
    %v1041 = vand.u32 2147483647, %v103
    %v1042 = vand.u32 %v1041, 8388607
    %v1043 = vor.u32 %v1042, 8388608
    %v1044 = vsub.s32 0, %v1043
    %v1045 = vadd.s32 %v1040, 1
    %vm1046 = vcmp.gt.s32.totalorder %v1045, 0
    %v1047 = vsel %vm1046, %v1045, 0
    %v1048 = vshrl.u32 %v1047, 5
    %v1049 = vand.u32 %v1047, 31
    %v1050 = vsub.s32 32, %v1049
    %v1051 = vshrl.u32 683565275, %v1050
    %v1052 = vshll.u32 683565275, %v1049
    %v1053 = vshrl.u32 2475754826, %v1050
    %v1054 = vor.u32 %v1052, %v1053
    %v1055 = vshll.u32 2475754826, %v1049
    %v1056 = vshrl.u32 2131351028, %v1050
    %v1057 = vor.u32 %v1055, %v1056
    %v1058 = vshll.u32 2131351028, %v1049
    %v1059 = vshrl.u32 2102212464, %v1050
    %v1060 = vor.u32 %v1058, %v1059
    %v1061 = vshll.u32 2102212464, %v1049
    %v1062 = vshrl.u32 920167782, %v1050
    %v1063 = vor.u32 %v1061, %v1062
    %v1064 = vshll.u32 920167782, %v1049
    %v1065 = vshrl.u32 1326507024, %v1050
    %v1066 = vor.u32 %v1064, %v1065
    %vm1067 = vcmp.lt.s32.totalorder %v1048, 1
    %vm1068 = vcmp.lt.s32.totalorder %v1048, 2
    %vm1069 = vcmp.lt.s32.totalorder %v1048, 3
    %vm1070 = vcmp.lt.s32.totalorder %v1048, 4
    %v1071 = vsel %vm1067, %v1051, %v1054
    %v1072 = vsel %vm1070, %v1060, 2102212464
    %v1073 = vsel %vm1069, %v1057, %v1072
    %v1074 = vsel %vm1068, %v1071, %v1073
    %v1075 = vsel %vm1067, %v1054, %v1057
    %v1076 = vsel %vm1070, %v1063, 920167782
    %v1077 = vsel %vm1069, %v1060, %v1076
    %v1078 = vsel %vm1068, %v1075, %v1077
    %v1079 = vsel %vm1067, %v1057, %v1060
    %v1080 = vsel %vm1070, %v1066, 1326507024
    %v1081 = vsel %vm1069, %v1063, %v1080
    %v1082 = vsel %vm1068, %v1079, %v1081
    %v1083 = vshll.u32 %v1043, 8
    %v1084 = vand.u32 %v1083, 65535
    %v1085 = vshrl.u32 %v1083, 16
    %v1086 = vand.u32 %v1082, 65535
    %v1087 = vshrl.u32 %v1082, 16
    %v1088 = vmul.u32 %v1084, %v1086
    %v1089 = vmul.u32 %v1084, %v1087
    %v1090 = vmul.u32 %v1085, %v1086
    %v1091 = vmul.u32 %v1085, %v1087
    %v1092 = vshll.u32 %v1089, 16
    %v1093 = vshrl.u32 %v1089, 16
    %v1094 = vshll.u32 %v1090, 16
    %v1095 = vshrl.u32 %v1090, 16
    %vm1096 = vc.u32 %v1088, %v1092
    %v1097 = vsel %vm1096, 1, 0
    %v1098 = vadd.s32 %v1088, %v1092
    %v1099 = vadd.s32 %v1091, %v1097
    %vm1100 = vc.u32 %v1098, %v1094
    %v1101 = vsel %vm1100, 1, 0
    %v1102 = vadd.s32 %v1098, %v1094
    %v1103 = vadd.s32 %v1099, %v1101
    %v1104 = vadd.s32 %v1103, %v1093
    %v1105 = vadd.s32 %v1104, %v1095
    %v1106 = vand.u32 %v1083, 65535
    %v1107 = vshrl.u32 %v1083, 16
    %v1108 = vand.u32 %v1078, 65535
    %v1109 = vshrl.u32 %v1078, 16
    %v1110 = vmul.u32 %v1106, %v1108
    %v1111 = vmul.u32 %v1106, %v1109
    %v1112 = vmul.u32 %v1107, %v1108
    %v1113 = vmul.u32 %v1107, %v1109
    %v1114 = vshll.u32 %v1111, 16
    %v1115 = vshrl.u32 %v1111, 16
    %v1116 = vshll.u32 %v1112, 16
    %v1117 = vshrl.u32 %v1112, 16
    %vm1118 = vc.u32 %v1110, %v1114
    %v1119 = vsel %vm1118, 1, 0
    %v1120 = vadd.s32 %v1110, %v1114
    %v1121 = vadd.s32 %v1113, %v1119
    %vm1122 = vc.u32 %v1120, %v1116
    %v1123 = vsel %vm1122, 1, 0
    %v1124 = vadd.s32 %v1120, %v1116
    %v1125 = vadd.s32 %v1121, %v1123
    %v1126 = vadd.s32 %v1125, %v1115
    %v1127 = vadd.s32 %v1126, %v1117
    %v1128 = vmul.u32 %v1083, %v1074
    %v1129 = vadd.s32 %v1105, %v1124
    %vm1130 = vc.u32 %v1105, %v1124
    %v1131 = vadd.s32 %v1127, 1
    %v1132 = vsel %vm1130, %v1131, %v1127
    %v1133 = vadd.s32 %v1128, %v1132
    %v1134 = vadd.s32 %v1133, 536870912
    %v1135 = vshrl.u32 %v1134, 30
    %v1136 = vshll.u32 %v1135, 30
    %v1137 = vsub.s32 %v1133, %v1136
    %vm1138 = vcmp.lt.s32.totalorder %v1137, 0
    %v1139 = vsub.s32 0, %v1137
    %v1140 = vsel %vm1138, %v1139, %v1137
    %v1141 = vclz %v1140
    %v1142 = vsub.s32 %v1141, 2
    %vm1143 = vcmp.gt.s32.totalorder 0, %v1142
    %v1144 = vsel %vm1143, 0, %v1142
    %v1145 = vsub.s32 32, %v1144
    %v1146 = vshll.u32 %v1137, %v1144
    %v1147 = vshrl.u32 %v1129, %v1145
    %v1148 = vor.u32 %v1146, %v1147
    %v1149 = vsub.s32 4294967266, %v1144
    %v1150 = vadd.s32 %v1149, 127
    %v1151 = vshll.u32 %v1150, 23
    %v1152 = vor.u32 4788187, %v1151
    %v1153 = vand.u32 2147483647, %v1152
    %v1155 = vcvt.s32.f32 %v1148
    %v1156 = vmul.f32 %v1155, %v1153
    %v1157 = vxor.u32 %v1156, 2147483648
    %v1158 = vsel %vm1037, %v1157, %v1156
    %v1159 = vsub.s32 4, %v1135
    %v1160 = vsel %vm1037, %v1159, %v1135
    %v1161 = vsel %vm1036, %v103, %v1158
    %v1162 = vsel %vm1036, 0, %v1160
    %v1163 = vmul.f32 %v1161, %v1161
    %v1164 = vmul.f32 %v1163, -0.001358992
    %v1165 = vadd.f32 %v1164, 0.041655596
    %v1166 = vmul.f32 %v1163, %v1165
    %v1167 = vadd.f32 %v1166, -0.4999988
    %v1168 = vmul.f32 %v1163, %v1167
    %v1169 = vadd.f32 1.0, %v1168
    %v1170 = vmul.f32 %v1161, %v1161
    %v1171 = vmul.f32 %v1170, -0.00019511016
    %v1172 = vadd.f32 %v1171, 0.008332121
    %v1173 = vmul.f32 %v1170, %v1172
    %v1174 = vadd.f32 %v1173, -0.16666654
    %v1175 = vmul.f32 %v1170, %v1174
    %v1176 = vadd.f32 %v1175, 1.0
    %v1177 = vmul.f32 %v1176, %v1161
    %vm1178 = vweird.f32 %v103
    %v1179 = vadd.s32 %v1162, 3
    %v1180 = vand.u32 %v1179, 3
    %vm1181 = vcmp.lt.s32.totalorder %v1180, 2
    %vm1182 = vcmp.eq.s32.totalorder %v1180, 0
    %v1183 = vxor.u32 %v1177, 2147483648
    %v1184 = vsel %vm1182, %v1169, %v1183
    %vm1185 = vcmp.eq.s32.totalorder %v1180, 2
    %v1186 = vxor.u32 %v1169, 2147483648
    %v1187 = vsel %vm1185, %v1186, %v1177
    %v1188 = vsel %vm1181, %v1184, %v1187
    %v1189 = vsel %vm1178, nan, %v1188
    %v1190 = vand.u32 2147483647, %v104
    %vm1191 = vcmp.le.f32.partialorder %v1190, 0.7853982
    %vm1192 = vcmp.lt.s32.totalorder %v104, 0
    %v1193 = vand.u32 %v104, 2139095040
    %v1194 = vshrl.u32 %v1193, 23
    %v1195 = vsub.s32 %v1194, 127
    %v1196 = vand.u32 2147483647, %v104
    %v1197 = vand.u32 %v1196, 8388607
    %v1198 = vor.u32 %v1197, 8388608
    %v1199 = vsub.s32 0, %v1198
    %v1200 = vadd.s32 %v1195, 1
    %vm1201 = vcmp.gt.s32.totalorder %v1200, 0
    %v1202 = vsel %vm1201, %v1200, 0
    %v1203 = vshrl.u32 %v1202, 5
    %v1204 = vand.u32 %v1202, 31
    %v1205 = vsub.s32 32, %v1204
    %v1206 = vshrl.u32 683565275, %v1205
    %v1207 = vshll.u32 683565275, %v1204
    %v1208 = vshrl.u32 2475754826, %v1205
    %v1209 = vor.u32 %v1207, %v1208
    %v1210 = vshll.u32 2475754826, %v1204
    %v1211 = vshrl.u32 2131351028, %v1205
    %v1212 = vor.u32 %v1210, %v1211
    %v1213 = vshll.u32 2131351028, %v1204
    %v1214 = vshrl.u32 2102212464, %v1205
    %v1215 = vor.u32 %v1213, %v1214
    %v1216 = vshll.u32 2102212464, %v1204
    %v1217 = vshrl.u32 920167782, %v1205
    %v1218 = vor.u32 %v1216, %v1217
    %v1219 = vshll.u32 920167782, %v1204
    %v1220 = vshrl.u32 1326507024, %v1205
    %v1221 = vor.u32 %v1219, %v1220
    %vm1222 = vcmp.lt.s32.totalorder %v1203, 1
    %vm1223 = vcmp.lt.s32.totalorder %v1203, 2
    %vm1224 = vcmp.lt.s32.totalorder %v1203, 3
    %vm1225 = vcmp.lt.s32.totalorder %v1203, 4
    %v1226 = vsel %vm1222, %v1206, %v1209
    %v1227 = vsel %vm1225, %v1215, 2102212464
    %v1228 = vsel %vm1224, %v1212, %v1227
    %v1229 = vsel %vm1223, %v1226, %v1228
    %v1230 = vsel %vm1222, %v1209, %v1212
    %v1231 = vsel %vm1225, %v1218, 920167782
    %v1232 = vsel %vm1224, %v1215, %v1231
    %v1233 = vsel %vm1223, %v1230, %v1232
    %v1234 = vsel %vm1222, %v1212, %v1215
    %v1235 = vsel %vm1225, %v1221, 1326507024
    %v1236 = vsel %vm1224, %v1218, %v1235
    %v1237 = vsel %vm1223, %v1234, %v1236
    %v1238 = vshll.u32 %v1198, 8
    %v1239 = vand.u32 %v1238, 65535
    %v1240 = vshrl.u32 %v1238, 16
    %v1241 = vand.u32 %v1237, 65535
    %v1242 = vshrl.u32 %v1237, 16
    %v1243 = vmul.u32 %v1239, %v1241
    %v1244 = vmul.u32 %v1239, %v1242
    %v1245 = vmul.u32 %v1240, %v1241
    %v1246 = vmul.u32 %v1240, %v1242
    %v1247 = vshll.u32 %v1244, 16
    %v1248 = vshrl.u32 %v1244, 16
    %v1249 = vshll.u32 %v1245, 16
    %v1250 = vshrl.u32 %v1245, 16
    %vm1251 = vc.u32 %v1243, %v1247
    %v1252 = vsel %vm1251, 1, 0
    %v1253 = vadd.s32 %v1243, %v1247
    %v1254 = vadd.s32 %v1246, %v1252
    %vm1255 = vc.u32 %v1253, %v1249
    %v1256 = vsel %vm1255, 1, 0
    %v1257 = vadd.s32 %v1253, %v1249
    %v1258 = vadd.s32 %v1254, %v1256
    %v1259 = vadd.s32 %v1258, %v1248
    %v1260 = vadd.s32 %v1259, %v1250
    %v1261 = vand.u32 %v1238, 65535
    %v1262 = vshrl.u32 %v1238, 16
    %v1263 = vand.u32 %v1233, 65535
    %v1264 = vshrl.u32 %v1233, 16
    %v1265 = vmul.u32 %v1261, %v1263
    %v1266 = vmul.u32 %v1261, %v1264
    %v1267 = vmul.u32 %v1262, %v1263
    %v1268 = vmul.u32 %v1262, %v1264
    %v1269 = vshll.u32 %v1266, 16
    %v1270 = vshrl.u32 %v1266, 16
    %v1271 = vshll.u32 %v1267, 16
    %v1272 = vshrl.u32 %v1267, 16
    %vm1273 = vc.u32 %v1265, %v1269
    %v1274 = vsel %vm1273, 1, 0
    %v1275 = vadd.s32 %v1265, %v1269
    %v1276 = vadd.s32 %v1268, %v1274
    %vm1277 = vc.u32 %v1275, %v1271
    %v1278 = vsel %vm1277, 1, 0
    %v1279 = vadd.s32 %v1275, %v1271
    %v1280 = vadd.s32 %v1276, %v1278
    %v1281 = vadd.s32 %v1280, %v1270
    %v1282 = vadd.s32 %v1281, %v1272
    %v1283 = vmul.u32 %v1238, %v1229
    %v1284 = vadd.s32 %v1260, %v1279
    %vm1285 = vc.u32 %v1260, %v1279
    %v1286 = vadd.s32 %v1282, 1
    %v1287 = vsel %vm1285, %v1286, %v1282
    %v1288 = vadd.s32 %v1283, %v1287
    %v1289 = vadd.s32 %v1288, 536870912
    %v1290 = vshrl.u32 %v1289, 30
    %v1291 = vshll.u32 %v1290, 30
    %v1292 = vsub.s32 %v1288, %v1291
    %vm1293 = vcmp.lt.s32.totalorder %v1292, 0
    %v1294 = vsub.s32 0, %v1292
    %v1295 = vsel %vm1293, %v1294, %v1292
    %v1296 = vclz %v1295
    %v1297 = vsub.s32 %v1296, 2
    %vm1298 = vcmp.gt.s32.totalorder 0, %v1297
    %v1299 = vsel %vm1298, 0, %v1297
    %v1300 = vsub.s32 32, %v1299
    %v1301 = vshll.u32 %v1292, %v1299
    %v1302 = vshrl.u32 %v1284, %v1300
    %v1303 = vor.u32 %v1301, %v1302
    %v1304 = vsub.s32 4294967266, %v1299
    %v1305 = vadd.s32 %v1304, 127
    %v1306 = vshll.u32 %v1305, 23
    %v1307 = vor.u32 4788187, %v1306
    %v1308 = vand.u32 2147483647, %v1307
    %v1310 = vcvt.s32.f32 %v1303
    %v1311 = vmul.f32 %v1310, %v1308
    %v1312 = vxor.u32 %v1311, 2147483648
    %v1313 = vsel %vm1192, %v1312, %v1311
    %v1314 = vsub.s32 4, %v1290
    %v1315 = vsel %vm1192, %v1314, %v1290
    %v1316 = vsel %vm1191, %v104, %v1313
    %v1317 = vsel %vm1191, 0, %v1315
    %v1318 = vmul.f32 %v1316, %v1316
    %v1319 = vmul.f32 %v1318, -0.001358992
    %v1320 = vadd.f32 %v1319, 0.041655596
    %v1321 = vmul.f32 %v1318, %v1320
    %v1322 = vadd.f32 %v1321, -0.4999988
    %v1323 = vmul.f32 %v1318, %v1322
    %v1324 = vadd.f32 1.0, %v1323
    %v1325 = vmul.f32 %v1316, %v1316
    %v1326 = vmul.f32 %v1325, -0.00019511016
    %v1327 = vadd.f32 %v1326, 0.008332121
    %v1328 = vmul.f32 %v1325, %v1327
    %v1329 = vadd.f32 %v1328, -0.16666654
    %v1330 = vmul.f32 %v1325, %v1329
    %v1331 = vadd.f32 %v1330, 1.0
    %v1332 = vmul.f32 %v1331, %v1316
    %vm1333 = vweird.f32 %v104
    %v1334 = vadd.s32 %v1317, 3
    %v1335 = vand.u32 %v1334, 3
    %vm1336 = vcmp.lt.s32.totalorder %v1335, 2
    %vm1337 = vcmp.eq.s32.totalorder %v1335, 0
    %v1338 = vxor.u32 %v1332, 2147483648
    %v1339 = vsel %vm1337, %v1324, %v1338
    %vm1340 = vcmp.eq.s32.totalorder %v1335, 2
    %v1341 = vxor.u32 %v1324, 2147483648
    %v1342 = vsel %vm1340, %v1341, %v1332
    %v1343 = vsel %vm1336, %v1339, %v1342
    %v1344 = vsel %vm1333, nan, %v1343
    %v1345 = vld [vmem:[#allocation2] sm:$0xff]
    %v1346 = vld [vmem:[#allocation2 + $0x8] sm:$0xff]
    %v1347 = vld [vmem:[#allocation2 + $0x38] sm:$0xff]
    %v1348 = vld [vmem:[#allocation2 + $0x40] sm:$0xff]
    %v1349 = vld [vmem:[#allocation2 + $0x70] sm:$0xff]
    %v1350 = vld [vmem:[#allocation2 + $0x78] sm:$0xff]
    %v1351 = vld [vmem:[#allocation2 + $0xa8] sm:$0xff]
    %v1352 = vld [vmem:[#allocation2 + $0xb0] sm:$0xff]
    %v1353 = vld [vmem:[#allocation2 + $0xe0] sm:$0xff]
    %v1354 = vld [vmem:[#allocation2 + $0xe8] sm:$0xff]
    %v1355 = vld [vmem:[#allocation2 + $0x118] sm:$0xff]
    %v1356 = vld [vmem:[#allocation2 + $0x120] sm:$0xff]
    %v1357 = vld [vmem:[#allocation2 + $0x150] sm:$0xff]
    %v1358 = vld [vmem:[#allocation2 + $0x158] sm:$0xff]
    %v1359 = vld [vmem:[#allocation2 + $0x188] sm:$0xff]
    %v1360 = vld [vmem:[#allocation2 + $0x190] sm:$0xff]
    %v1361 = vld [vmem:[#allocation2 + $0x1c0] sm:$0xff]
    %v1362 = vld [vmem:[#allocation2 + $0x1c8] sm:$0xff]
    %v1363 = vld [vmem:[#allocation2 + $0x1f8] sm:$0xff]
    %v1364 = vld [vmem:[#allocation2 + $0x200] sm:$0xff]
    %v1365 = vld [vmem:[#allocation2 + $0x230] sm:$0xff]
    %v1366 = vld [vmem:[#allocation2 + $0x238] sm:$0xff]
    %v1367 = vld [vmem:[#allocation2 + $0x268] sm:$0xff]
    %v1368 = vld [vmem:[#allocation2 + $0x270] sm:$0xff]
    %v1369 = vld [vmem:[#allocation2 + $0x2a0] sm:$0xff]
    %v1370 = vld [vmem:[#allocation2 + $0x2a8] sm:$0xff]
    %v1371 = vld [vmem:[#allocation2 + $0x2d8] sm:$0xff]
    %v1372 = vld [vmem:[#allocation2 + $0x2e0] sm:$0xff]
    %v1373 = vld [vmem:[#allocation2 + $0x310] sm:$0xff]
    %v1374 = vld [vmem:[#allocation2 + $0x318] sm:$0xff]
    %v1375 = vld [vmem:[#allocation2 + $0x348] sm:$0xff]
    %v1376 = vld [vmem:[#allocation2 + $0x350] sm:$0xff]
    %1377 = vmatpush.msra.mxu0 %v1375
    %1378 = vmatpush.msra.mxu0 %v1373
    %1379 = vmatpush.msra.mxu0 %v1371
    %1380 = vmatpush.msra.mxu0 %v1369
    %1381 = vmatpush.msra.mxu0 %v1367
    %1382 = vmatpush.msra.mxu0 %v1365
    %1383 = vmatpush.msra.mxu0 %v1363
    %1384 = vmatpush.msra.mxu0 %v1361
    %1385 = vmatpush.msra.mxu0 %v1359
    %1386 = vmatpush.msra.mxu0 %v1357
    %1387 = vmatpush.msra.mxu0 %v1355
    %1388 = vmatpush.msra.mxu0 %v1353
    %1389 = vmatpush.msra.mxu0 %v1351
    %1390 = vmatpush.msra.mxu0 %v1349
    %1391 = vmatpush.msra.mxu0 %v1347
    %1392 = vmatpush.msra.mxu0 %v1345
    %1393 = vmatmul.f32.gmra.mxu0 %v259
    %v1394 = vpop.f32.mrf.mxu0
    %v1395 = vadd.f32 0.0, %v1394
    %1396 = vmatmul.f32.gmra.mxu0 %v414
    %v1397 = vpop.f32.mrf.mxu0
    %v1398 = vadd.f32 0.0, %v1397
    %1399 = vmatmul.f32.gmra.mxu0 %v569
    %v1400 = vpop.f32.mrf.mxu0
    %v1401 = vadd.f32 0.0, %v1400
    %1402 = vmatmul.f32.gmra.mxu0 %v724
    %v1403 = vpop.f32.mrf.mxu0
    %v1404 = vadd.f32 0.0, %v1403
    %1405 = vmatmul.f32.gmra.mxu0 %v879
    %v1406 = vpop.f32.mrf.mxu0
    %v1407 = vadd.f32 0.0, %v1406
    %1408 = vmatmul.f32.gmra.mxu0 %v1034
    %v1409 = vpop.f32.mrf.mxu0
    %v1410 = vadd.f32 0.0, %v1409
    %1411 = vmatmul.f32.gmra.mxu0 %v1189
    %v1412 = vpop.f32.mrf.mxu0
    %v1413 = vadd.f32 0.0, %v1412
    %1414 = vmatmul.f32.gmra.mxu0 %v1344
    %v1415 = vpop.f32.mrf.mxu0
    %v1416 = vadd.f32 0.0, %v1415
    %1417 = vdwg.mxu0
    %1418 = vmatpush.msra.mxu0 %v1376
    %1419 = vmatpush.msra.mxu0 %v1374
    %1420 = vmatpush.msra.mxu0 %v1372
    %1421 = vmatpush.msra.mxu0 %v1370
    %1422 = vmatpush.msra.mxu0 %v1368
    %1423 = vmatpush.msra.mxu0 %v1366
    %1424 = vmatpush.msra.mxu0 %v1364
    %1425 = vmatpush.msra.mxu0 %v1362
    %1426 = vmatpush.msra.mxu0 %v1360
    %1427 = vmatpush.msra.mxu0 %v1358
    %1428 = vmatpush.msra.mxu0 %v1356
    %1429 = vmatpush.msra.mxu0 %v1354
    %1430 = vmatpush.msra.mxu0 %v1352
    %1431 = vmatpush.msra.mxu0 %v1350
    %1432 = vmatpush.msra.mxu0 %v1348
    %1433 = vmatpush.msra.mxu0 %v1346
    %1434 = vmatmul.f32.gmra.mxu0 %v259
    %v1435 = vpop.f32.mrf.mxu0
    %v1436 = vadd.f32 0.0, %v1435
    %1437 = vmatmul.f32.gmra.mxu0 %v414
    %v1438 = vpop.f32.mrf.mxu0
    %v1439 = vadd.f32 0.0, %v1438
    %1440 = vmatmul.f32.gmra.mxu0 %v569
    %v1441 = vpop.f32.mrf.mxu0
    %v1442 = vadd.f32 0.0, %v1441
    %1443 = vmatmul.f32.gmra.mxu0 %v724
    %v1444 = vpop.f32.mrf.mxu0
    %v1445 = vadd.f32 0.0, %v1444
    %1446 = vmatmul.f32.gmra.mxu0 %v879
    %v1447 = vpop.f32.mrf.mxu0
    %v1448 = vadd.f32 0.0, %v1447
    %1449 = vmatmul.f32.gmra.mxu0 %v1034
    %v1450 = vpop.f32.mrf.mxu0
    %v1451 = vadd.f32 0.0, %v1450
    %1452 = vmatmul.f32.gmra.mxu0 %v1189
    %v1453 = vpop.f32.mrf.mxu0
    %v1454 = vadd.f32 0.0, %v1453
    %1455 = vmatmul.f32.gmra.mxu0 %v1344
    %v1456 = vpop.f32.mrf.mxu0
    %v1457 = vadd.f32 0.0, %v1456
    %1458 = vdwg.mxu0
    %v1459 = vperm.slane %v35, 0
    %v1460 = vadd.f32 %v1395, %v1459
    %v1461 = vadd.f32 %v1398, %v1459
    %v1462 = vadd.f32 %v1401, %v1459
    %v1463 = vadd.f32 %v1404, %v1459
    %v1464 = vadd.f32 %v1407, %v1459
    %v1465 = vadd.f32 %v1410, %v1459
    %v1466 = vadd.f32 %v1413, %v1459
    %v1467 = vadd.f32 %v1416, %v1459
    %v1468 = vperm.slane %v36, 0
    %v1469 = vadd.f32 %v1436, %v1468
    %v1470 = vadd.f32 %v1439, %v1468
    %v1471 = vadd.f32 %v1442, %v1468
    %v1472 = vadd.f32 %v1445, %v1468
    %v1473 = vadd.f32 %v1448, %v1468
    %v1474 = vadd.f32 %v1451, %v1468
    %v1475 = vadd.f32 %v1454, %v1468
    %v1476 = vadd.f32 %v1457, %v1468
    %v1477 = vld [vmem:[%s1] sm:$0xff]
    %v1478 = vld [vmem:[%s1 + $0x8] sm:$0xff]
    %v1479 = vld [vmem:[%s1 + $0x10] sm:$0xff]
    %v1480 = vld [vmem:[%s1 + $0x18] sm:$0xff]
    %v1481 = vld [vmem:[%s1 + $0x20] sm:$0xff]
    %v1482 = vld [vmem:[%s1 + $0x28] sm:$0xff]
    %v1483 = vld [vmem:[%s1 + $0x30] sm:$0xff]
    %v1484 = vld [vmem:[%s1 + $0x38] sm:$0xff]
    %v1485 = vld [vmem:[#allocation2 + $0x30] sm:$0xff]
    %v1486 = vld [vmem:[#allocation2 + $0x68] sm:$0xff]
    %v1487 = vperm.slane %v37, 0
    %vm1488 = vcmask 130048
    %v1490 = vsel %vm1488, %v1477, 0
    %v1493 = vsel %vm1488, %v1478, 0
    %v1496 = vsel %vm1488, %v1479, 0
    %v1499 = vsel %vm1488, %v1480, 0
    %v1502 = vsel %vm1488, %v1481, 0
    %v1505 = vsel %vm1488, %v1482, 0
    %v1508 = vsel %vm1488, %v1483, 0
    %v1511 = vsel %vm1488, %v1484, 0
    %1513 = vmatpush.msra.mxu0 0.0
    %1514 = vmatpush.msra.mxu0 0.0
    %1515 = vmatpush.msra.mxu0 0.0
    %1516 = vmatpush.msra.mxu0 0.0
    %1517 = vmatpush.msra.mxu0 0.0
    %1518 = vmatpush.msra.mxu0 0.0
    %1519 = vmatpush.msra.mxu0 0.0
    %1520 = vmatpush.msra.mxu0 0.0
    %1521 = vmatpush.msra.mxu0 0.0
    %1522 = vmatpush.msra.mxu0 0.0
    %1523 = vmatpush.msra.mxu0 0.0
    %1524 = vmatpush.msra.mxu0 0.0
    %1525 = vmatpush.msra.mxu0 0.0
    %1526 = vmatpush.msra.mxu0 0.0
    %1527 = vmatpush.msra.mxu0 %v1486
    %1528 = vmatpush.msra.mxu0 %v1485
    %1529 = vmatmul.f32.gmra.mxu0 %v1490
    %v1530 = vpop.f32.mrf.mxu0
    %v1531 = vadd.f32 %v1487, %v1530
    %1532 = vmatmul.f32.gmra.mxu0 %v1493
    %v1533 = vpop.f32.mrf.mxu0
    %v1534 = vadd.f32 %v1487, %v1533
    %1535 = vmatmul.f32.gmra.mxu0 %v1496
    %v1536 = vpop.f32.mrf.mxu0
    %v1537 = vadd.f32 %v1487, %v1536
    %1538 = vmatmul.f32.gmra.mxu0 %v1499
    %v1539 = vpop.f32.mrf.mxu0
    %v1540 = vadd.f32 %v1487, %v1539
    %1541 = vmatmul.f32.gmra.mxu0 %v1502
    %v1542 = vpop.f32.mrf.mxu0
    %v1543 = vadd.f32 %v1487, %v1542
    %1544 = vmatmul.f32.gmra.mxu0 %v1505
    %v1545 = vpop.f32.mrf.mxu0
    %v1546 = vadd.f32 %v1487, %v1545
    %1547 = vmatmul.f32.gmra.mxu0 %v1508
    %v1548 = vpop.f32.mrf.mxu0
    %v1549 = vadd.f32 %v1487, %v1548
    %1550 = vmatmul.f32.gmra.mxu0 %v1511
    %v1551 = vpop.f32.mrf.mxu0
    %v1552 = vadd.f32 %v1487, %v1551
    %1553 = vdwg.mxu0
    %v1554 = vmul.f32 %v1531, %v1460
    %v1555 = vmul.f32 %v1534, %v1461
    %v1556 = vmul.f32 %v1537, %v1462
    %v1557 = vmul.f32 %v1540, %v1463
    %v1558 = vmul.f32 %v1543, %v1464
    %v1559 = vmul.f32 %v1546, %v1465
    %v1560 = vmul.f32 %v1549, %v1466
    %v1561 = vmul.f32 %v1552, %v1467
    %v1562 = vld [vmem:[#allocation2 + $0x10] sm:$0xff]
    %v1563 = vld [vmem:[#allocation2 + $0x48] sm:$0xff]
    %v1564 = vld [vmem:[#allocation2 + $0x80] sm:$0xff]
    %v1565 = vld [vmem:[#allocation2 + $0xb8] sm:$0xff]
    %v1566 = vld [vmem:[#allocation2 + $0xf0] sm:$0xff]
    %v1567 = vld [vmem:[#allocation2 + $0x128] sm:$0xff]
    %v1568 = vld [vmem:[#allocation2 + $0x160] sm:$0xff]
    %v1569 = vld [vmem:[#allocation2 + $0x198] sm:$0xff]
    %v1570 = vld [vmem:[#allocation2 + $0x1d0] sm:$0xff]
    %v1571 = vld [vmem:[#allocation2 + $0x208] sm:$0xff]
    %v1572 = vld [vmem:[#allocation2 + $0x240] sm:$0xff]
    %v1573 = vld [vmem:[#allocation2 + $0x278] sm:$0xff]
    %v1574 = vld [vmem:[#allocation2 + $0x2b0] sm:$0xff]
    %v1575 = vld [vmem:[#allocation2 + $0x2e8] sm:$0xff]
    %v1576 = vld [vmem:[#allocation2 + $0x320] sm:$0xff]
    %v1577 = vld [vmem:[#allocation2 + $0x358] sm:$0xff]
    %1578 = vmatpush.msra.mxu0 %v1577
    %1579 = vmatpush.msra.mxu0 %v1576
    %1580 = vmatpush.msra.mxu0 %v1575
    %1581 = vmatpush.msra.mxu0 %v1574
    %1582 = vmatpush.msra.mxu0 %v1573
    %1583 = vmatpush.msra.mxu0 %v1572
    %1584 = vmatpush.msra.mxu0 %v1571
    %1585 = vmatpush.msra.mxu0 %v1570
    %1586 = vmatpush.msra.mxu0 %v1569
    %1587 = vmatpush.msra.mxu0 %v1568
    %1588 = vmatpush.msra.mxu0 %v1567
    %1589 = vmatpush.msra.mxu0 %v1566
    %1590 = vmatpush.msra.mxu0 %v1565
    %1591 = vmatpush.msra.mxu0 %v1564
    %1592 = vmatpush.msra.mxu0 %v1563
    %1593 = vmatpush.msra.mxu0 %v1562
    %1594 = vmatmul.f32.gmra.mxu0 %v1554
    %v1595 = vpop.f32.mrf.mxu0
    %v1596 = vadd.f32 0.0, %v1595
    %1597 = vmatmul.f32.gmra.mxu0 %v1555
    %v1598 = vpop.f32.mrf.mxu0
    %v1599 = vadd.f32 0.0, %v1598
    %1600 = vmatmul.f32.gmra.mxu0 %v1556
    %v1601 = vpop.f32.mrf.mxu0
    %v1602 = vadd.f32 0.0, %v1601
    %1603 = vmatmul.f32.gmra.mxu0 %v1557
    %v1604 = vpop.f32.mrf.mxu0
    %v1605 = vadd.f32 0.0, %v1604
    %1606 = vmatmul.f32.gmra.mxu0 %v1558
    %v1607 = vpop.f32.mrf.mxu0
    %v1608 = vadd.f32 0.0, %v1607
    %1609 = vmatmul.f32.gmra.mxu0 %v1559
    %v1610 = vpop.f32.mrf.mxu0
    %v1611 = vadd.f32 0.0, %v1610
    %1612 = vmatmul.f32.gmra.mxu0 %v1560
    %v1613 = vpop.f32.mrf.mxu0
    %v1614 = vadd.f32 0.0, %v1613
    %1615 = vmatmul.f32.gmra.mxu0 %v1561
    %v1616 = vpop.f32.mrf.mxu0
    %v1617 = vadd.f32 0.0, %v1616
    %1618 = vdwg.mxu0
    %v1619 = vlaneseq
    %v1620 = vand.u32 %v1619, 127
    %vm1621 = vcmp.ge.s32.totalorder %v1620, 0
    %vm1622 = vcmp.lt.s32.totalorder %v1620, 32
    %vm1623 = vmand %vm1621, %vm1622
    %v1624 = vsel %vm1623, %v1596, -inf
    %v1625 = vsel %vm1623, %v1599, -inf
    %v1626 = vsel %vm1623, %v1602, -inf
    %v1627 = vsel %vm1623, %v1605, -inf
    %v1628 = vsel %vm1623, %v1608, -inf
    %v1629 = vsel %vm1623, %v1611, -inf
    %v1630 = vsel %vm1623, %v1614, -inf
    %v1631 = vsel %vm1623, %v1617, -inf
    %1632 = vmax.xlane.f32.xlu0 %v1624
    %v1633 = vpop.xlane.xlu0 %1632
    %1634 = vmax.xlane.f32.xlu0 %v1625
    %v1635 = vpop.xlane.xlu0 %1634
    %1636 = vmax.xlane.f32.xlu0 %v1626
    %v1637 = vpop.xlane.xlu0 %1636
    %1638 = vmax.xlane.f32.xlu0 %v1627
    %v1639 = vpop.xlane.xlu0 %1638
    %1640 = vmax.xlane.f32.xlu0 %v1628
    %v1641 = vpop.xlane.xlu0 %1640
    %1642 = vmax.xlane.f32.xlu0 %v1629
    %v1643 = vpop.xlane.xlu0 %1642
    %1644 = vmax.xlane.f32.xlu0 %v1630
    %v1645 = vpop.xlane.xlu0 %1644
    %1646 = vmax.xlane.f32.xlu0 %v1631
    %v1647 = vpop.xlane.xlu0 %1646
    %v1648 = vsel %vm1623, %v1633, 0.0
    %v1649 = vsel %vm1623, %v1635, 0.0
    %v1650 = vsel %vm1623, %v1637, 0.0
    %v1651 = vsel %vm1623, %v1639, 0.0
    %v1652 = vsel %vm1623, %v1641, 0.0
    %v1653 = vsel %vm1623, %v1643, 0.0
    %v1654 = vsel %vm1623, %v1645, 0.0
    %v1655 = vsel %vm1623, %v1647, 0.0
    %vm1656 = vcmp.ge.s32.totalorder %v1620, 32
    %vm1657 = vcmp.lt.s32.totalorder %v1620, 64
    %vm1658 = vmand %vm1656, %vm1657
    %v1659 = vsel %vm1658, %v1596, -inf
    %v1660 = vsel %vm1658, %v1599, -inf
    %v1661 = vsel %vm1658, %v1602, -inf
    %v1662 = vsel %vm1658, %v1605, -inf
    %v1663 = vsel %vm1658, %v1608, -inf
    %v1664 = vsel %vm1658, %v1611, -inf
    %v1665 = vsel %vm1658, %v1614, -inf
    %v1666 = vsel %vm1658, %v1617, -inf
    %1667 = vmax.xlane.f32.xlu0 %v1659
    %v1668 = vpop.xlane.xlu0 %1667
    %1669 = vmax.xlane.f32.xlu0 %v1660
    %v1670 = vpop.xlane.xlu0 %1669
    %1671 = vmax.xlane.f32.xlu0 %v1661
    %v1672 = vpop.xlane.xlu0 %1671
    %1673 = vmax.xlane.f32.xlu0 %v1662
    %v1674 = vpop.xlane.xlu0 %1673
    %1675 = vmax.xlane.f32.xlu0 %v1663
    %v1676 = vpop.xlane.xlu0 %1675
    %1677 = vmax.xlane.f32.xlu0 %v1664
    %v1678 = vpop.xlane.xlu0 %1677
    %1679 = vmax.xlane.f32.xlu0 %v1665
    %v1680 = vpop.xlane.xlu0 %1679
    %1681 = vmax.xlane.f32.xlu0 %v1666
    %v1682 = vpop.xlane.xlu0 %1681
    %v1683 = vsel %vm1658, %v1668, %v1648
    %v1684 = vsel %vm1658, %v1670, %v1649
    %v1685 = vsel %vm1658, %v1672, %v1650
    %v1686 = vsel %vm1658, %v1674, %v1651
    %v1687 = vsel %vm1658, %v1676, %v1652
    %v1688 = vsel %vm1658, %v1678, %v1653
    %v1689 = vsel %vm1658, %v1680, %v1654
    %v1690 = vsel %vm1658, %v1682, %v1655
    %vm1691 = vcmp.ge.s32.totalorder %v1620, 64
    %vm1692 = vcmp.lt.s32.totalorder %v1620, 96
    %vm1693 = vmand %vm1691, %vm1692
    %v1694 = vsel %vm1693, %v1596, -inf
    %v1695 = vsel %vm1693, %v1599, -inf
    %v1696 = vsel %vm1693, %v1602, -inf
    %v1697 = vsel %vm1693, %v1605, -inf
    %v1698 = vsel %vm1693, %v1608, -inf
    %v1699 = vsel %vm1693, %v1611, -inf
    %v1700 = vsel %vm1693, %v1614, -inf
    %v1701 = vsel %vm1693, %v1617, -inf
    %1702 = vmax.xlane.f32.xlu0 %v1694
    %v1703 = vpop.xlane.xlu0 %1702
    %1704 = vmax.xlane.f32.xlu0 %v1695
    %v1705 = vpop.xlane.xlu0 %1704
    %1706 = vmax.xlane.f32.xlu0 %v1696
    %v1707 = vpop.xlane.xlu0 %1706
    %1708 = vmax.xlane.f32.xlu0 %v1697
    %v1709 = vpop.xlane.xlu0 %1708
    %1710 = vmax.xlane.f32.xlu0 %v1698
    %v1711 = vpop.xlane.xlu0 %1710
    %1712 = vmax.xlane.f32.xlu0 %v1699
    %v1713 = vpop.xlane.xlu0 %1712
    %1714 = vmax.xlane.f32.xlu0 %v1700
    %v1715 = vpop.xlane.xlu0 %1714
    %1716 = vmax.xlane.f32.xlu0 %v1701
    %v1717 = vpop.xlane.xlu0 %1716
    %v1718 = vsel %vm1693, %v1703, %v1683
    %v1719 = vsel %vm1693, %v1705, %v1684
    %v1720 = vsel %vm1693, %v1707, %v1685
    %v1721 = vsel %vm1693, %v1709, %v1686
    %v1722 = vsel %vm1693, %v1711, %v1687
    %v1723 = vsel %vm1693, %v1713, %v1688
    %v1724 = vsel %vm1693, %v1715, %v1689
    %v1725 = vsel %vm1693, %v1717, %v1690
    %vm1726 = vcmp.ge.s32.totalorder %v1620, 96
    %vm1727 = vcmp.lt.s32.totalorder %v1620, 128
    %vm1728 = vmand %vm1726, %vm1727
    %v1729 = vsel %vm1728, %v1596, -inf
    %v1730 = vsel %vm1728, %v1599, -inf
    %v1731 = vsel %vm1728, %v1602, -inf
    %v1732 = vsel %vm1728, %v1605, -inf
    %v1733 = vsel %vm1728, %v1608, -inf
    %v1734 = vsel %vm1728, %v1611, -inf
    %v1735 = vsel %vm1728, %v1614, -inf
    %v1736 = vsel %vm1728, %v1617, -inf
    %1737 = vmax.xlane.f32.xlu0 %v1729
    %v1738 = vpop.xlane.xlu0 %1737
    %1739 = vmax.xlane.f32.xlu0 %v1730
    %v1740 = vpop.xlane.xlu0 %1739
    %1741 = vmax.xlane.f32.xlu0 %v1731
    %v1742 = vpop.xlane.xlu0 %1741
    %1743 = vmax.xlane.f32.xlu0 %v1732
    %v1744 = vpop.xlane.xlu0 %1743
    %1745 = vmax.xlane.f32.xlu0 %v1733
    %v1746 = vpop.xlane.xlu0 %1745
    %1747 = vmax.xlane.f32.xlu0 %v1734
    %v1748 = vpop.xlane.xlu0 %1747
    %1749 = vmax.xlane.f32.xlu0 %v1735
    %v1750 = vpop.xlane.xlu0 %1749
    %1751 = vmax.xlane.f32.xlu0 %v1736
    %v1752 = vpop.xlane.xlu0 %1751
    %v1753 = vsel %vm1728, %v1738, %v1718
    %v1754 = vsel %vm1728, %v1740, %v1719
    %v1755 = vsel %vm1728, %v1742, %v1720
    %v1756 = vsel %vm1728, %v1744, %v1721
    %v1757 = vsel %vm1728, %v1746, %v1722
    %v1758 = vsel %vm1728, %v1748, %v1723
    %v1759 = vsel %vm1728, %v1750, %v1724
    %v1760 = vsel %vm1728, %v1752, %v1725
    %v1761 = vsub.f32 %v1596, %v1753
    %v1762 = vsub.f32 %v1599, %v1754
    %v1763 = vsub.f32 %v1602, %v1755
    %v1764 = vsub.f32 %v1605, %v1756
    %v1765 = vsub.f32 %v1608, %v1757
    %v1766 = vsub.f32 %v1611, %v1758
    %v1767 = vsub.f32 %v1614, %v1759
    %v1768 = vsub.f32 %v1617, %v1760
    %v1769 = vmul.f32 %v1761, 1.442695
    %v1770 = vpow.pop %v1769
    %v1771 = vmul.f32 %v1762, 1.442695
    %v1772 = vpow.pop %v1771
    %v1773 = vmul.f32 %v1763, 1.442695
    %v1774 = vpow.pop %v1773
    %v1775 = vmul.f32 %v1764, 1.442695
    %v1776 = vpow.pop %v1775
    %v1777 = vmul.f32 %v1765, 1.442695
    %v1778 = vpow.pop %v1777
    %v1779 = vmul.f32 %v1766, 1.442695
    %v1780 = vpow.pop %v1779
    %v1781 = vmul.f32 %v1767, 1.442695
    %v1782 = vpow.pop %v1781
    %v1783 = vmul.f32 %v1768, 1.442695
    %v1784 = vpow.pop %v1783
    %v1785 = vld [vmem:[#allocation2 + $0x18] sm:$0xff]
    %v1786 = vld [vmem:[#allocation2 + $0x20] sm:$0xff]
    %v1787 = vld [vmem:[#allocation2 + $0x50] sm:$0xff]
    %v1788 = vld [vmem:[#allocation2 + $0x58] sm:$0xff]
    %v1789 = vld [vmem:[#allocation2 + $0x88] sm:$0xff]
    %v1790 = vld [vmem:[#allocation2 + $0x90] sm:$0xff]
    %v1791 = vld [vmem:[#allocation2 + $0xc0] sm:$0xff]
    %v1792 = vld [vmem:[#allocation2 + $0xc8] sm:$0xff]
    %v1793 = vld [vmem:[#allocation2 + $0xf8] sm:$0xff]
    %v1794 = vld [vmem:[#allocation2 + $0x100] sm:$0xff]
    %v1795 = vld [vmem:[#allocation2 + $0x130] sm:$0xff]
    %v1796 = vld [vmem:[#allocation2 + $0x138] sm:$0xff]
    %v1797 = vld [vmem:[#allocation2 + $0x168] sm:$0xff]
    %v1798 = vld [vmem:[#allocation2 + $0x170] sm:$0xff]
    %v1799 = vld [vmem:[#allocation2 + $0x1a0] sm:$0xff]
    %v1800 = vld [vmem:[#allocation2 + $0x1a8] sm:$0xff]
    %v1801 = vld [vmem:[#allocation2 + $0x1d8] sm:$0xff]
    %v1802 = vld [vmem:[#allocation2 + $0x1e0] sm:$0xff]
    %v1803 = vld [vmem:[#allocation2 + $0x210] sm:$0xff]
    %v1804 = vld [vmem:[#allocation2 + $0x218] sm:$0xff]
    %v1805 = vld [vmem:[#allocation2 + $0x248] sm:$0xff]
    %v1806 = vld [vmem:[#allocation2 + $0x250] sm:$0xff]
    %v1807 = vld [vmem:[#allocation2 + $0x280] sm:$0xff]
    %v1808 = vld [vmem:[#allocation2 + $0x288] sm:$0xff]
    %v1809 = vld [vmem:[#allocation2 + $0x2b8] sm:$0xff]
    %v1810 = vld [vmem:[#allocation2 + $0x2c0] sm:$0xff]
    %v1811 = vld [vmem:[#allocation2 + $0x2f0] sm:$0xff]
    %v1812 = vld [vmem:[#allocation2 + $0x2f8] sm:$0xff]
    %v1813 = vld [vmem:[#allocation2 + $0x328] sm:$0xff]
    %v1814 = vld [vmem:[#allocation2 + $0x330] sm:$0xff]
    %v1815 = vld [vmem:[#allocation2 + $0x360] sm:$0xff]
    %v1816 = vld [vmem:[#allocation2 + $0x368] sm:$0xff]
    %1817 = vmatpush.msra.mxu0 %v1815
    %1818 = vmatpush.msra.mxu0 %v1813
    %1819 = vmatpush.msra.mxu0 %v1811
    %1820 = vmatpush.msra.mxu0 %v1809
    %1821 = vmatpush.msra.mxu0 %v1807
    %1822 = vmatpush.msra.mxu0 %v1805
    %1823 = vmatpush.msra.mxu0 %v1803
    %1824 = vmatpush.msra.mxu0 %v1801
    %1825 = vmatpush.msra.mxu0 %v1799
    %1826 = vmatpush.msra.mxu0 %v1797
    %1827 = vmatpush.msra.mxu0 %v1795
    %1828 = vmatpush.msra.mxu0 %v1793
    %1829 = vmatpush.msra.mxu0 %v1791
    %1830 = vmatpush.msra.mxu0 %v1789
    %1831 = vmatpush.msra.mxu0 %v1787
    %1832 = vmatpush.msra.mxu0 %v1785
    %1833 = vmatmul.f32.gmra.mxu0 %v1770
    %v1834 = vpop.f32.mrf.mxu0
    %v1835 = vadd.f32 0.0, %v1834
    %1836 = vmatmul.f32.gmra.mxu0 %v1772
    %v1837 = vpop.f32.mrf.mxu0
    %v1838 = vadd.f32 0.0, %v1837
    %1839 = vmatmul.f32.gmra.mxu0 %v1774
    %v1840 = vpop.f32.mrf.mxu0
    %v1841 = vadd.f32 0.0, %v1840
    %1842 = vmatmul.f32.gmra.mxu0 %v1776
    %v1843 = vpop.f32.mrf.mxu0
    %v1844 = vadd.f32 0.0, %v1843
    %1845 = vmatmul.f32.gmra.mxu0 %v1778
    %v1846 = vpop.f32.mrf.mxu0
    %v1847 = vadd.f32 0.0, %v1846
    %1848 = vmatmul.f32.gmra.mxu0 %v1780
    %v1849 = vpop.f32.mrf.mxu0
    %v1850 = vadd.f32 0.0, %v1849
    %1851 = vmatmul.f32.gmra.mxu0 %v1782
    %v1852 = vpop.f32.mrf.mxu0
    %v1853 = vadd.f32 0.0, %v1852
    %1854 = vmatmul.f32.gmra.mxu0 %v1784
    %v1855 = vpop.f32.mrf.mxu0
    %v1856 = vadd.f32 0.0, %v1855
    %1857 = vdwg.mxu0
    %1858 = vmatpush.msra.mxu0 %v1816
    %1859 = vmatpush.msra.mxu0 %v1814
    %1860 = vmatpush.msra.mxu0 %v1812
    %1861 = vmatpush.msra.mxu0 %v1810
    %1862 = vmatpush.msra.mxu0 %v1808
    %1863 = vmatpush.msra.mxu0 %v1806
    %1864 = vmatpush.msra.mxu0 %v1804
    %1865 = vmatpush.msra.mxu0 %v1802
    %1866 = vmatpush.msra.mxu0 %v1800
    %1867 = vmatpush.msra.mxu0 %v1798
    %1868 = vmatpush.msra.mxu0 %v1796
    %1869 = vmatpush.msra.mxu0 %v1794
    %1870 = vmatpush.msra.mxu0 %v1792
    %1871 = vmatpush.msra.mxu0 %v1790
    %1872 = vmatpush.msra.mxu0 %v1788
    %1873 = vmatpush.msra.mxu0 %v1786
    %1874 = vmatmul.f32.gmra.mxu0 %v1770
    %v1875 = vpop.f32.mrf.mxu0
    %v1876 = vadd.f32 0.0, %v1875
    %1877 = vmatmul.f32.gmra.mxu0 %v1772
    %v1878 = vpop.f32.mrf.mxu0
    %v1879 = vadd.f32 0.0, %v1878
    %1880 = vmatmul.f32.gmra.mxu0 %v1774
    %v1881 = vpop.f32.mrf.mxu0
    %v1882 = vadd.f32 0.0, %v1881
    %1883 = vmatmul.f32.gmra.mxu0 %v1776
    %v1884 = vpop.f32.mrf.mxu0
    %v1885 = vadd.f32 0.0, %v1884
    %1886 = vmatmul.f32.gmra.mxu0 %v1778
    %v1887 = vpop.f32.mrf.mxu0
    %v1888 = vadd.f32 0.0, %v1887
    %1889 = vmatmul.f32.gmra.mxu0 %v1780
    %v1890 = vpop.f32.mrf.mxu0
    %v1891 = vadd.f32 0.0, %v1890
    %1892 = vmatmul.f32.gmra.mxu0 %v1782
    %v1893 = vpop.f32.mrf.mxu0
    %v1894 = vadd.f32 0.0, %v1893
    %1895 = vmatmul.f32.gmra.mxu0 %v1784
    %v1896 = vpop.f32.mrf.mxu0
    %v1897 = vadd.f32 0.0, %v1896
    %1898 = vdwg.mxu0
    %v1899 = vmul.f32 %v1835, %v1469
    %v1900 = vmul.f32 %v1838, %v1470
    %v1901 = vmul.f32 %v1841, %v1471
    %v1902 = vmul.f32 %v1844, %v1472
    %v1903 = vmul.f32 %v1847, %v1473
    %v1904 = vmul.f32 %v1850, %v1474
    %v1905 = vmul.f32 %v1853, %v1475
    %v1906 = vmul.f32 %v1856, %v1476
    %v1907 = vrcp.pop %v1876
    %v1908 = vmul.f32 %v1876, %v1907
    %v1909 = vsub.f32 1.0, %v1908
    %v1910 = vmul.f32 %v1907, %v1909
    %v1911 = vadd.f32 %v1907, %v1910
    %vm1912 = vweird.f32 %v1876
    %vm1913 = vweird.f32 %v1907
    %vm1914 = vmor %vm1912, %vm1913
    %v1915 = vsel %vm1914, %v1907, %v1911
    %v1916 = vand.u32 2147483647, %v1876
    %vm1917 = vcmp.eq.f32.partialorder %v1916, 8.507059e+37
    %v1918 = vand.u32 %v1876, 2147483648
    %v1919 = vor.u32 1.1754944e-38, %v1918
    %v1920 = vsel %vm1917, %v1919, %v1915
    %v1921 = vmul.f32 %v1899, %v1920
    %v1922 = vrcp.pop %v1879
    %v1923 = vmul.f32 %v1879, %v1922
    %v1924 = vsub.f32 1.0, %v1923
    %v1925 = vmul.f32 %v1922, %v1924
    %v1926 = vadd.f32 %v1922, %v1925
    %vm1927 = vweird.f32 %v1879
    %vm1928 = vweird.f32 %v1922
    %vm1929 = vmor %vm1927, %vm1928
    %v1930 = vsel %vm1929, %v1922, %v1926
    %v1931 = vand.u32 2147483647, %v1879
    %vm1932 = vcmp.eq.f32.partialorder %v1931, 8.507059e+37
    %v1933 = vand.u32 %v1879, 2147483648
    %v1934 = vor.u32 1.1754944e-38, %v1933
    %v1935 = vsel %vm1932, %v1934, %v1930
    %v1936 = vmul.f32 %v1900, %v1935
    %v1937 = vrcp.pop %v1882
    %v1938 = vmul.f32 %v1882, %v1937
    %v1939 = vsub.f32 1.0, %v1938
    %v1940 = vmul.f32 %v1937, %v1939
    %v1941 = vadd.f32 %v1937, %v1940
    %vm1942 = vweird.f32 %v1882
    %vm1943 = vweird.f32 %v1937
    %vm1944 = vmor %vm1942, %vm1943
    %v1945 = vsel %vm1944, %v1937, %v1941
    %v1946 = vand.u32 2147483647, %v1882
    %vm1947 = vcmp.eq.f32.partialorder %v1946, 8.507059e+37
    %v1948 = vand.u32 %v1882, 2147483648
    %v1949 = vor.u32 1.1754944e-38, %v1948
    %v1950 = vsel %vm1947, %v1949, %v1945
    %v1951 = vmul.f32 %v1901, %v1950
    %v1952 = vrcp.pop %v1885
    %v1953 = vmul.f32 %v1885, %v1952
    %v1954 = vsub.f32 1.0, %v1953
    %v1955 = vmul.f32 %v1952, %v1954
    %v1956 = vadd.f32 %v1952, %v1955
    %vm1957 = vweird.f32 %v1885
    %vm1958 = vweird.f32 %v1952
    %vm1959 = vmor %vm1957, %vm1958
    %v1960 = vsel %vm1959, %v1952, %v1956
    %v1961 = vand.u32 2147483647, %v1885
    %vm1962 = vcmp.eq.f32.partialorder %v1961, 8.507059e+37
    %v1963 = vand.u32 %v1885, 2147483648
    %v1964 = vor.u32 1.1754944e-38, %v1963
    %v1965 = vsel %vm1962, %v1964, %v1960
    %v1966 = vmul.f32 %v1902, %v1965
    %v1967 = vrcp.pop %v1888
    %v1968 = vmul.f32 %v1888, %v1967
    %v1969 = vsub.f32 1.0, %v1968
    %v1970 = vmul.f32 %v1967, %v1969
    %v1971 = vadd.f32 %v1967, %v1970
    %vm1972 = vweird.f32 %v1888
    %vm1973 = vweird.f32 %v1967
    %vm1974 = vmor %vm1972, %vm1973
    %v1975 = vsel %vm1974, %v1967, %v1971
    %v1976 = vand.u32 2147483647, %v1888
    %vm1977 = vcmp.eq.f32.partialorder %v1976, 8.507059e+37
    %v1978 = vand.u32 %v1888, 2147483648
    %v1979 = vor.u32 1.1754944e-38, %v1978
    %v1980 = vsel %vm1977, %v1979, %v1975
    %v1981 = vmul.f32 %v1903, %v1980
    %v1982 = vrcp.pop %v1891
    %v1983 = vmul.f32 %v1891, %v1982
    %v1984 = vsub.f32 1.0, %v1983
    %v1985 = vmul.f32 %v1982, %v1984
    %v1986 = vadd.f32 %v1982, %v1985
    %vm1987 = vweird.f32 %v1891
    %vm1988 = vweird.f32 %v1982
    %vm1989 = vmor %vm1987, %vm1988
    %v1990 = vsel %vm1989, %v1982, %v1986
    %v1991 = vand.u32 2147483647, %v1891
    %vm1992 = vcmp.eq.f32.partialorder %v1991, 8.507059e+37
    %v1993 = vand.u32 %v1891, 2147483648
    %v1994 = vor.u32 1.1754944e-38, %v1993
    %v1995 = vsel %vm1992, %v1994, %v1990
    %v1996 = vmul.f32 %v1904, %v1995
    %v1997 = vrcp.pop %v1894
    %v1998 = vmul.f32 %v1894, %v1997
    %v1999 = vsub.f32 1.0, %v1998
    %v2000 = vmul.f32 %v1997, %v1999
    %v2001 = vadd.f32 %v1997, %v2000
    %vm2002 = vweird.f32 %v1894
    %vm2003 = vweird.f32 %v1997
    %vm2004 = vmor %vm2002, %vm2003
    %v2005 = vsel %vm2004, %v1997, %v2001
    %v2006 = vand.u32 2147483647, %v1894
    %vm2007 = vcmp.eq.f32.partialorder %v2006, 8.507059e+37
    %v2008 = vand.u32 %v1894, 2147483648
    %v2009 = vor.u32 1.1754944e-38, %v2008
    %v2010 = vsel %vm2007, %v2009, %v2005
    %v2011 = vmul.f32 %v1905, %v2010
    %v2012 = vrcp.pop %v1897
    %v2013 = vmul.f32 %v1897, %v2012
    %v2014 = vsub.f32 1.0, %v2013
    %v2015 = vmul.f32 %v2012, %v2014
    %v2016 = vadd.f32 %v2012, %v2015
    %vm2017 = vweird.f32 %v1897
    %vm2018 = vweird.f32 %v2012
    %vm2019 = vmor %vm2017, %vm2018
    %v2020 = vsel %vm2019, %v2012, %v2016
    %v2021 = vand.u32 2147483647, %v1897
    %vm2022 = vcmp.eq.f32.partialorder %v2021, 8.507059e+37
    %v2023 = vand.u32 %v1897, 2147483648
    %v2024 = vor.u32 1.1754944e-38, %v2023
    %v2025 = vsel %vm2022, %v2024, %v2020
    %v2026 = vmul.f32 %v1906, %v2025
    %v2027 = vld [vmem:[#allocation2 + $0x28] sm:$0xff]
    %v2028 = vld [vmem:[#allocation2 + $0x60] sm:$0xff]
    %v2029 = vld [vmem:[#allocation2 + $0x98] sm:$0xff]
    %v2030 = vld [vmem:[#allocation2 + $0xd0] sm:$0xff]
    %v2031 = vld [vmem:[#allocation2 + $0x108] sm:$0xff]
    %v2032 = vld [vmem:[#allocation2 + $0x140] sm:$0xff]
    %v2033 = vld [vmem:[#allocation2 + $0x178] sm:$0xff]
    %v2034 = vld [vmem:[#allocation2 + $0x1b0] sm:$0xff]
    %v2035 = vld [vmem:[#allocation2 + $0x1e8] sm:$0xff]
    %v2036 = vld [vmem:[#allocation2 + $0x220] sm:$0xff]
    %v2037 = vld [vmem:[#allocation2 + $0x258] sm:$0xff]
    %v2038 = vld [vmem:[#allocation2 + $0x290] sm:$0xff]
    %v2039 = vld [vmem:[#allocation2 + $0x2c8] sm:$0xff]
    %v2040 = vld [vmem:[#allocation2 + $0x300] sm:$0xff]
    %v2041 = vld [vmem:[#allocation2 + $0x338] sm:$0xff]
    %v2042 = vld [vmem:[#allocation2 + $0x370] sm:$0xff]
    %v2043 = vperm.slane %v38, 0
    %2044 = vmatpush.msra.mxu0 %v2042
    %2045 = vmatpush.msra.mxu0 %v2041
    %2046 = vmatpush.msra.mxu0 %v2040
    %2047 = vmatpush.msra.mxu0 %v2039
    %2048 = vmatpush.msra.mxu0 %v2038
    %2049 = vmatpush.msra.mxu0 %v2037
    %2050 = vmatpush.msra.mxu0 %v2036
    %2051 = vmatpush.msra.mxu0 %v2035
    %2052 = vmatpush.msra.mxu0 %v2034
    %2053 = vmatpush.msra.mxu0 %v2033
    %2054 = vmatpush.msra.mxu0 %v2032
    %2055 = vmatpush.msra.mxu0 %v2031
    %2056 = vmatpush.msra.mxu0 %v2030
    %2057 = vmatpush.msra.mxu0 %v2029
    %2058 = vmatpush.msra.mxu0 %v2028
    %2059 = vmatpush.msra.mxu0 %v2027
    %2060 = vmatmul.f32.gmra.mxu0 %v1921
    %v2061 = vpop.f32.mrf.mxu0
    %v2062 = vadd.f32 %v2043, %v2061
    %2063 = vmatmul.f32.gmra.mxu0 %v1936
    %v2064 = vpop.f32.mrf.mxu0
    %v2065 = vadd.f32 %v2043, %v2064
    %2066 = vmatmul.f32.gmra.mxu0 %v1951
    %v2067 = vpop.f32.mrf.mxu0
    %v2068 = vadd.f32 %v2043, %v2067
    %2069 = vmatmul.f32.gmra.mxu0 %v1966
    %v2070 = vpop.f32.mrf.mxu0
    %v2071 = vadd.f32 %v2043, %v2070
    %2072 = vmatmul.f32.gmra.mxu0 %v1981
    %v2073 = vpop.f32.mrf.mxu0
    %v2074 = vadd.f32 %v2043, %v2073
    %2075 = vmatmul.f32.gmra.mxu0 %v1996
    %v2076 = vpop.f32.mrf.mxu0
    %v2077 = vadd.f32 %v2043, %v2076
    %2078 = vmatmul.f32.gmra.mxu0 %v2011
    %v2079 = vpop.f32.mrf.mxu0
    %v2080 = vadd.f32 %v2043, %v2079
    %2081 = vmatmul.f32.gmra.mxu0 %v2026
    %v2082 = vpop.f32.mrf.mxu0
    %v2083 = vadd.f32 %v2043, %v2082
    %2084 = vdwg.mxu0
    %2085 = vst.msk [vmem:[%s4] sm:$0xff] %vm1488, %v2062
    %2086 = vst.msk [vmem:[%s4 + $0x8] sm:$0xff] %vm1488, %v2065
    %2087 = vst.msk [vmem:[%s4 + $0x10] sm:$0xff] %vm1488, %v2068
    %2088 = vst.msk [vmem:[%s4 + $0x18] sm:$0xff] %vm1488, %v2071
    %2089 = vst.msk [vmem:[%s4 + $0x20] sm:$0xff] %vm1488, %v2074
    %2090 = vst.msk [vmem:[%s4 + $0x28] sm:$0xff] %vm1488, %v2077
    %2091 = vst.msk [vmem:[%s4 + $0x30] sm:$0xff] %vm1488, %v2080
    %2092 = vst.msk [vmem:[%s4 + $0x38] sm:$0xff] %vm1488, %v2083
    // Predicated region
    $region22: #{mmha_forward.1} parent=1 // pred_check
      _
    $region23: #{mmha_forward.1} parent=1 // pred_check_branch
      %2094 = sbr.rel (0) target = $region25
    $region24: #{mmha_forward.1} parent=1 // pred_region
      _
    $region25: #{mmha_forward.1} parent=1 // pred_fallthru
      _
    // Predicated region
    $region26: #{mmha_forward.1} parent=1 // pred_check
      _
    $region27: #{mmha_forward.1} parent=1 // pred_check_branch
      %2096 = sbr.rel (0) target = $region29
    $region28: #{mmha_forward.1} parent=1 // pred_region
      _
    $region29: #{mmha_forward.1} parent=1 // pred_fallthru
      _
    %2097 = vsyncpa [#allocation3], 1

</llo_original>
